<compile_context>
chip_gen: v6e
topology: v6e:2x2x1
jax: 0.10.0
libtpu: 0.0.40
codegen_flags: <defaults>
</compile_context>

<pallas_src>
import functools
import math

import numpy as np
import jax
import jax.numpy as jnp
from jax.experimental import pallas as pl
from jax.experimental.pallas import tpu as pltpu

FB_LIMITS = (100, 4000)
HFS_FC_LIMITS = (16000, 22000)
LFS_FC_LIMITS = (20, 200)

_SQRT_HALF = 0.7071067811865476
_GELU_TANH_C = 0.7978845608028654  # sqrt(2/pi)


# ----------------------------------------------------------------------------
# In-kernel math helpers
# ----------------------------------------------------------------------------
def _erf_f32(x):
    """Abramowitz & Stegun 7.1.26 rational erf approximation, |err| < 1.5e-7."""
    a1, a2, a3, a4, a5 = (0.254829592, -0.284496736, 1.421413741,
                          -1.453152027, 1.061405429)
    p = 0.3275911
    ax = jnp.abs(x)
    t = 1.0 / (1.0 + p * ax)
    poly = ((((a5 * t + a4) * t + a3) * t + a2) * t + a1) * t
    y = 1.0 - poly * jnp.exp(-ax * ax)
    return jnp.where(x < 0.0, -y, y)


def _gelu(x, approximate):
    if approximate:
        inner = _GELU_TANH_C * (x + 0.044715 * x * x * x)
        return 0.5 * x * (1.0 + jnp.tanh(inner))
    return 0.5 * x * (1.0 + _erf_f32(x * _SQRT_HALF))


# ----------------------------------------------------------------------------
# Pallas kernel: the PEFT MLP stack on one batch tile
# ----------------------------------------------------------------------------
def _niirf_kernel(n_hidden, inv_h, approx_gelu, x_ref, *refs):
    """refs = per layer (Wfc[bf16, resident], fcb[(1,F)], u[(tb,F)], v[(tb,H)])
              for n_hidden hidden layers + the output layer, then est_ref."""
    est_ref = refs[-1]
    prm = refs[:-1]

    x = x_ref[...]  # (tb, H) float32 Fourier features

    for n in range(n_hidden + 1):
        w_ref, fcb_ref, u_ref, v_ref = prm[4 * n: 4 * n + 4]
        # LoRA modulation: z = u * mean(v * x, -1, keepdims=True)
        z = u_ref[...] * (jnp.sum(v_ref[...] * x, axis=-1, keepdims=True) * inv_h)
        # fc matmul on the MXU, bf16 operands, f32 accumulation.
        y = (jnp.dot(x.astype(w_ref.dtype), w_ref[...],
                     preferred_element_type=jnp.float32)
             + fcb_ref[...] + z)
        if n < n_hidden:
            x = _gelu(y, approx_gelu)       # dropout: eval mode -> identity
        else:
            est_ref[...] = y                # output layer: Identity activation


# ----------------------------------------------------------------------------
# Wrapper
# ----------------------------------------------------------------------------
def niirf_forward(phis, thetas, sidxs, params, *, hidden_layers, hidden_features,
                  n_peaks, tb=256, approx_gelu=False, weight_dtype=jnp.bfloat16):
    B = phis.shape[0]
    H = hidden_features
    out_features = (3 * n_peaks + 4) * 2
    assert params["Wfc"][-1].shape[1] == out_features

    n_grid = pl.cdiv(B, tb)
    b_pad = n_grid * tb
    pad = b_pad - B

    phis_p = jnp.pad(phis.astype(jnp.float32), (0, pad))
    thetas_p = jnp.pad(thetas.astype(jnp.float32), (0, pad))
    sidxs_p = jnp.pad(sidxs, (0, pad))  # pad rows use listener 0; discarded later

    # Fourier-feature embedding on the VPU/XLA side (K=2 matmul is not MXU work).
    feat = jnp.stack([phis_p - jnp.float32(np.pi), thetas_p], axis=-1)   # (B_pad, 2)
    emb = feat @ params["bmat"].T                                         # (B_pad, H/2)
    x0 = jnp.concatenate([jnp.sin(emb), jnp.cos(emb)], axis=-1).astype(jnp.float32)

    args = [x0]
    in_specs = [pl.BlockSpec((tb, H), lambda i: (i, 0))]

    for n in range(hidden_layers + 1):
        w = params["Wfc"][n].astype(weight_dtype)                # (H, F) resident
        fcb = params["fcb"][n].astype(jnp.float32)               # (1, F) resident
        # PEFT terms as per-row gathers instead of one-hot matmuls.
        u = (params["Wa"][n][sidxs_p] + params["ba"][n]).astype(jnp.float32)  # (B_pad, F)
        v = (params["Wb"][n][sidxs_p] + params["bb"][n]).astype(jnp.float32)  # (B_pad, H)
        f = w.shape[1]
        args += [w, fcb, u, v]
        in_specs += [
            pl.BlockSpec(w.shape, lambda i: (0, 0)),     # constant block, fetched once
            pl.BlockSpec((1, f), lambda i: (0, 0)),
            pl.BlockSpec((tb, f), lambda i: (i, 0)),
            pl.BlockSpec((tb, H), lambda i: (i, 0)),
        ]

    kernel = functools.partial(_niirf_kernel, hidden_layers, 1.0 / H, approx_gelu)

    est = pl.pallas_call(
        kernel,
        out_shape=jax.ShapeDtypeStruct((b_pad, out_features), jnp.float32),
        grid=(n_grid,),
        in_specs=in_specs,
        out_specs=pl.BlockSpec((tb, out_features), lambda i: (i, 0)),
        compiler_params=pltpu.CompilerParams(
            dimension_semantics=("parallel",),
            vmem_limit_bytes=32 * 1024 * 1024),
    )(*args)

    estimate = est[:B].reshape(B, 2, -1)

    # Tail of the module forward: split + sigmoid scaling (cheap, done in plain JAX).
    k = n_peaks + 2
    gain = estimate[..., :k]
    fc_raw = estimate[..., k:2 * k]
    fb_raw = estimate[..., 2 * k:]
    fc = params["fc_width"][None, None, :] * jax.nn.sigmoid(fc_raw) + params["fc_low"][None, None, :]
    fb = params["fb_width"] * jax.nn.sigmoid(fb_raw) + params["fb_low"]
    return gain, fc, fb


# ----------------------------------------------------------------------------
# Deterministic parameter construction (mirrors the module's shapes)
# ----------------------------------------------------------------------------
def init_params(key, *, fc_limits, hidden_features, hidden_layers, n_listeners,
                scale=1.0):
    H = hidden_features
    n_peaks = len(fc_limits)
    out_features = (3 * n_peaks + 4) * 2

    bmat = scale * np.random.default_rng(0).normal(0.0, 1.0, (H // 2, 2))
    fc_low = [LFS_FC_LIMITS[0]] + [x[0] for x in fc_limits] + [HFS_FC_LIMITS[0]]
    fc_width = ([LFS_FC_LIMITS[1] - LFS_FC_LIMITS[0]]
                + [x[1] - x[0] for x in fc_limits]
                + [HFS_FC_LIMITS[1] - HFS_FC_LIMITS[0]])

    params = {
        "bmat": jnp.asarray(bmat.astype(np.float32)),
        "fc_low": jnp.asarray(fc_low, dtype=jnp.float32),
        "fc_width": jnp.asarray(fc_width, dtype=jnp.float32),
        "fb_low": jnp.float32(FB_LIMITS[0]),
        "fb_width": jnp.float32(FB_LIMITS[1] - FB_LIMITS[0]),
        "Wfc": [], "fcb": [], "Wa": [], "ba": [], "Wb": [], "bb": [],
    }

    n_layers = hidden_layers + 1
    keys = jax.random.split(key, 6 * n_layers)
    ki = iter(keys)

    def rnd(shape, s=0.05):
        return (s * jax.random.normal(next(ki), shape)).astype(jnp.float32)

    for n in range(n_layers):
        f = out_features if n == hidden_layers else H
        # fc: Linear(H, f, bias=True) stored transposed (in, out)
        params["Wfc"].append(rnd((H, f)))
        params["fcb"].append(rnd((1, f)))
        # lora_a: the module zero-inits its weight; use small random values here so the
        # per-listener gather path is actually exercised by the correctness test.
        params["Wa"].append(rnd((n_listeners, f)))
        params["ba"].append(rnd((1, f)))
        # lora_b: always Linear(n_listeners, hidden_features)
        params["Wb"].append(rnd((n_listeners, H)))
        params["bb"].append(rnd((1, H)))
    return params


# ----------------------------------------------------------------------------
# Pure-JAX reference (full f32, exact erf GELU) for the correctness check
# ----------------------------------------------------------------------------
def ref_forward(phis, thetas, sidxs, params, *, hidden_layers, n_peaks):
    n_listeners = params["Wa"][0].shape[0]
    onehot = jax.nn.one_hot(sidxs, n_listeners, dtype=jnp.float32)
    feat = jnp.stack([phis - jnp.float32(np.pi), thetas], axis=-1)
    emb = feat @ params["bmat"].T
    x = jnp.concatenate([jnp.sin(emb), jnp.cos(emb)], axis=-1)

    def layer(x, n, act):
        u = onehot @ params["Wa"][n] + params["ba"][n]
        v = onehot @ params["Wb"][n] + params["bb"][n]
        z = u * jnp.mean(v * x, axis=-1, keepdims=True)
        y = x @ params["Wfc"][n] + params["fcb"][n] + z
        return act(y)

    for n in range(hidden_layers):
        x = layer(x, n, lambda t: jax.nn.gelu(t, approximate=False))
    est = layer(x, hidden_layers, lambda t: t)

    estimate = est.reshape(phis.shape[0], 2, -1)
    k = n_peaks + 2
    gain = estimate[..., :k]
    fc = params["fc_width"][None, None, :] * jax.nn.sigmoid(estimate[..., k:2 * k]) \
        + params["fc_low"][None, None, :]
    fb = params["fb_width"] * jax.nn.sigmoid(estimate[..., 2 * k:]) + params["fb_low"]
    return gain, fc, fb


# ----------------------------------------------------------------------------
if __name__ == "__main__":
    FC_LIMITS = ((200, 2000), (2000, 8000))   # 2 peaks -> out_features = 20
    HIDDEN = 128                              # module default hidden_features
    HIDDEN_LAYERS = 1
    N_LISTENERS = 64
    B = 200                                   # not a multiple of the tile -> tests padding
    TB = 128                                  # 2 grid steps (use 256 on v6e/v7x at scale)

    key = jax.random.PRNGKey(0)
    kp, kt, ks, kw = jax.random.split(key, 4)
    phis = jax.random.uniform(kp, (B,), jnp.float32, 0.0, 2.0 * math.pi)
    thetas = jax.random.uniform(kt, (B,), jnp.float32, -math.pi / 2, math.pi / 2)
    sidxs = jax.random.randint(ks, (B,), 0, N_LISTENERS)

    params = init_params(kw, fc_limits=FC_LIMITS, hidden_features=HIDDEN,
                         hidden_layers=HIDDEN_LAYERS, n_listeners=N_LISTENERS)

    gain, fc, fb = niirf_forward(
        phis, thetas, sidxs, params,
        hidden_layers=HIDDEN_LAYERS, hidden_features=HIDDEN,
        n_peaks=len(FC_LIMITS), tb=TB)
    gain, fc, fb = jax.block_until_ready((gain, fc, fb))

    rg, rfc, rfb = ref_forward(phis, thetas, sidxs, params,
                               hidden_layers=HIDDEN_LAYERS, n_peaks=len(FC_LIMITS))

    n_peaks = len(FC_LIMITS)
    assert gain.shape == (B, 2, n_peaks + 2), gain.shape
    assert fc.shape == (B, 2, n_peaks + 2), fc.shape
    assert fb.shape == (B, 2, n_peaks), fb.shape

    # Tolerance loosened for bf16 fc weights (f32 reference); ~3e-3 abs error expected.
    np.testing.assert_allclose(np.asarray(gain), np.asarray(rg), rtol=2e-2, atol=2e-2)
    np.testing.assert_allclose(np.asarray(fc), np.asarray(rfc), rtol=2e-2, atol=2e-2)
    np.testing.assert_allclose(np.asarray(fb), np.asarray(rfb), rtol=2e-2, atol=2e-2)
    print("KERNEL_OK")
</pallas_src>

<mosaic_0001>
module attributes {stable_mosaic.version = 11 : i64} {
  func.func @_niirf_kernel(%arg0: i32, %arg1: memref<128x128xf32, #tpu.memory_space<vmem>>, %arg2: memref<128x128xbf16, #tpu.memory_space<vmem>>, %arg3: memref<1x128xf32, #tpu.memory_space<vmem>>, %arg4: memref<128x128xf32, #tpu.memory_space<vmem>>, %arg5: memref<128x128xf32, #tpu.memory_space<vmem>>, %arg6: memref<128x20xbf16, #tpu.memory_space<vmem>>, %arg7: memref<1x20xf32, #tpu.memory_space<vmem>>, %arg8: memref<128x20xf32, #tpu.memory_space<vmem>>, %arg9: memref<128x128xf32, #tpu.memory_space<vmem>>, %arg10: memref<128x20xf32, #tpu.memory_space<vmem>>) attributes {dimension_semantics = [#tpu.dimension_semantics<parallel>], iteration_bounds = array<i64: 2>, scalar_prefetch = 0 : i64, scratch_operands = 0 : i64, tpu.core_type = #tpu.core_type<tc>, window_params = [{transform_indices = @transform_0, window_bounds = array<i64: 128, 128>}, {pipeline_mode = #tpu.pipeline_mode<synchronous>, transform_indices = @transform_1, window_bounds = array<i64: 128, 128>}, {pipeline_mode = #tpu.pipeline_mode<synchronous>, transform_indices = @transform_2, window_bounds = array<i64: 1, 128>}, {transform_indices = @transform_3, window_bounds = array<i64: 128, 128>}, {transform_indices = @transform_4, window_bounds = array<i64: 128, 128>}, {pipeline_mode = #tpu.pipeline_mode<synchronous>, transform_indices = @transform_5, window_bounds = array<i64: 128, 20>}, {pipeline_mode = #tpu.pipeline_mode<synchronous>, transform_indices = @transform_6, window_bounds = array<i64: 1, 20>}, {transform_indices = @transform_7, window_bounds = array<i64: 128, 20>}, {transform_indices = @transform_8, window_bounds = array<i64: 128, 128>}, {transform_indices = @transform_9, window_bounds = array<i64: 128, 20>}]} {
    %c0 = arith.constant 0 : index
    %c0_0 = arith.constant 0 : index
    %0 = vector.load %arg1[%c0, %c0_0] : memref<128x128xf32, #tpu.memory_space<vmem>>, vector<128x128xf32>
    %c0_1 = arith.constant 0 : index
    %c0_2 = arith.constant 0 : index
    %1 = vector.load %arg4[%c0_1, %c0_2] : memref<128x128xf32, #tpu.memory_space<vmem>>, vector<128x128xf32>
    %c0_3 = arith.constant 0 : index
    %c0_4 = arith.constant 0 : index
    %2 = vector.load %arg5[%c0_3, %c0_4] : memref<128x128xf32, #tpu.memory_space<vmem>>, vector<128x128xf32>
    %3 = arith.mulf %2, %0 : vector<128x128xf32>
    %cst = arith.constant dense<0.000000e+00> : vector<128xf32>
    %4 = vector.multi_reduction <add>, %3, %cst [1] : vector<128x128xf32> to vector<128xf32>
    %5 = vector.shape_cast %4 : vector<128xf32> to vector<128x1xf32>
    %cst_5 = arith.constant 7.812500e-03 : f32
    %6 = vector.broadcast %cst_5 : f32 to vector<128x1xf32>
    %7 = arith.mulf %5, %6 : vector<128x1xf32>
    %8 = vector.broadcast %7 : vector<128x1xf32> to vector<128x128xf32>
    %9 = arith.mulf %1, %8 : vector<128x128xf32>
    %10 = arith.truncf %0 : vector<128x128xf32> to vector<128x128xbf16>
    %c0_6 = arith.constant 0 : index
    %c0_7 = arith.constant 0 : index
    %11 = vector.load %arg2[%c0_6, %c0_7] : memref<128x128xbf16, #tpu.memory_space<vmem>>, vector<128x128xbf16>
    %cst_8 = arith.constant dense<0.000000e+00> : vector<128x128xf32>
    %12 = tpu.matmul %10, %11, %cst_8 {dimension_numbers = #tpu.dot_dimension_numbers<[1], [0], [0], [1], [0, 0, 1, 1], [], []>} : vector<128x128xbf16>, vector<128x128xbf16>, vector<128x128xf32> -> vector<128x128xf32>
    %c0_9 = arith.constant 0 : index
    %c0_10 = arith.constant 0 : index
    %13 = vector.load %arg3[%c0_9, %c0_10] : memref<1x128xf32, #tpu.memory_space<vmem>>, vector<1x128xf32>
    %14 = vector.broadcast %13 : vector<1x128xf32> to vector<128x128xf32>
    %15 = arith.addf %12, %14 : vector<128x128xf32>
    %16 = arith.addf %15, %9 : vector<128x128xf32>
    %cst_11 = arith.constant 5.000000e-01 : f32
    %17 = vector.broadcast %cst_11 : f32 to vector<128x128xf32>
    %18 = arith.mulf %17, %16 : vector<128x128xf32>
    %cst_12 = arith.constant 0.707106769 : f32
    %19 = vector.broadcast %cst_12 : f32 to vector<128x128xf32>
    %20 = arith.mulf %16, %19 : vector<128x128xf32>
    %21 = math.absf %20 : vector<128x128xf32>
    %cst_13 = arith.constant 0.327591091 : f32
    %22 = vector.broadcast %cst_13 : f32 to vector<128x128xf32>
    %23 = arith.mulf %22, %21 : vector<128x128xf32>
    %cst_14 = arith.constant 1.000000e+00 : f32
    %24 = vector.broadcast %cst_14 : f32 to vector<128x128xf32>
    %25 = arith.addf %24, %23 : vector<128x128xf32>
    %cst_15 = arith.constant 1.000000e+00 : f32
    %26 = vector.broadcast %cst_15 : f32 to vector<128x128xf32>
    %27 = arith.divf %26, %25 : vector<128x128xf32>
    %cst_16 = arith.constant 1.06140542 : f32
    %28 = vector.broadcast %cst_16 : f32 to vector<128x128xf32>
    %29 = arith.mulf %28, %27 : vector<128x128xf32>
    %cst_17 = arith.constant -1.45315206 : f32
    %30 = vector.broadcast %cst_17 : f32 to vector<128x128xf32>
    %31 = arith.addf %29, %30 : vector<128x128xf32>
    %32 = arith.mulf %31, %27 : vector<128x128xf32>
    %cst_18 = arith.constant 1.42141378 : f32
    %33 = vector.broadcast %cst_18 : f32 to vector<128x128xf32>
    %34 = arith.addf %32, %33 : vector<128x128xf32>
    %35 = arith.mulf %34, %27 : vector<128x128xf32>
    %cst_19 = arith.constant -0.284496725 : f32
    %36 = vector.broadcast %cst_19 : f32 to vector<128x128xf32>
    %37 = arith.addf %35, %36 : vector<128x128xf32>
    %38 = arith.mulf %37, %27 : vector<128x128xf32>
    %cst_20 = arith.constant 0.254829586 : f32
    %39 = vector.broadcast %cst_20 : f32 to vector<128x128xf32>
    %40 = arith.addf %38, %39 : vector<128x128xf32>
    %41 = arith.mulf %40, %27 : vector<128x128xf32>
    %cst_21 = arith.constant 0.000000e+00 : f32
    %42 = vector.broadcast %cst_21 : f32 to vector<128x128xf32>
    %43 = arith.subf %42, %21 : vector<128x128xf32>
    %44 = arith.mulf %43, %21 : vector<128x128xf32>
    %45 = math.exp %44 : vector<128x128xf32>
    %46 = arith.mulf %41, %45 : vector<128x128xf32>
    %cst_22 = arith.constant 1.000000e+00 : f32
    %47 = vector.broadcast %cst_22 : f32 to vector<128x128xf32>
    %48 = arith.subf %47, %46 : vector<128x128xf32>
    %cst_23 = arith.constant 0.000000e+00 : f32
    %49 = vector.broadcast %cst_23 : f32 to vector<128x128xf32>
    %50 = arith.cmpf olt, %20, %49 : vector<128x128xf32>
    %cst_24 = arith.constant 0.000000e+00 : f32
    %51 = vector.broadcast %cst_24 : f32 to vector<128x128xf32>
    %52 = arith.subf %51, %48 : vector<128x128xf32>
    %53 = arith.select %50, %52, %48 : vector<128x128xi1>, vector<128x128xf32>
    %cst_25 = arith.constant 1.000000e+00 : f32
    %54 = vector.broadcast %cst_25 : f32 to vector<128x128xf32>
    %55 = arith.addf %54, %53 : vector<128x128xf32>
    %56 = arith.mulf %18, %55 : vector<128x128xf32>
    %c0_26 = arith.constant 0 : index
    %c0_27 = arith.constant 0 : index
    %57 = vector.load %arg8[%c0_26, %c0_27] : memref<128x20xf32, #tpu.memory_space<vmem>>, vector<128x20xf32>
    %c0_28 = arith.constant 0 : index
    %c0_29 = arith.constant 0 : index
    %58 = vector.load %arg9[%c0_28, %c0_29] : memref<128x128xf32, #tpu.memory_space<vmem>>, vector<128x128xf32>
    %59 = arith.mulf %58, %56 : vector<128x128xf32>
    %cst_30 = arith.constant dense<0.000000e+00> : vector<128xf32>
    %60 = vector.multi_reduction <add>, %59, %cst_30 [1] : vector<128x128xf32> to vector<128xf32>
    %61 = vector.shape_cast %60 : vector<128xf32> to vector<128x1xf32>
    %cst_31 = arith.constant 7.812500e-03 : f32
    %62 = vector.broadcast %cst_31 : f32 to vector<128x1xf32>
    %63 = arith.mulf %61, %62 : vector<128x1xf32>
    %64 = vector.broadcast %63 : vector<128x1xf32> to vector<128x20xf32>
    %65 = arith.mulf %57, %64 : vector<128x20xf32>
    %66 = arith.truncf %56 : vector<128x128xf32> to vector<128x128xbf16>
    %c0_32 = arith.constant 0 : index
    %c0_33 = arith.constant 0 : index
    %67 = vector.load %arg6[%c0_32, %c0_33] : memref<128x20xbf16, #tpu.memory_space<vmem>>, vector<128x20xbf16>
    %cst_34 = arith.constant dense<0.000000e+00> : vector<128x20xf32>
    %68 = tpu.matmul %66, %67, %cst_34 {dimension_numbers = #tpu.dot_dimension_numbers<[1], [0], [0], [1], [0, 0, 1, 1], [], []>} : vector<128x128xbf16>, vector<128x20xbf16>, vector<128x20xf32> -> vector<128x20xf32>
    %c0_35 = arith.constant 0 : index
    %c0_36 = arith.constant 0 : index
    %69 = vector.load %arg7[%c0_35, %c0_36] : memref<1x20xf32, #tpu.memory_space<vmem>>, vector<1x20xf32>
    %70 = vector.broadcast %69 : vector<1x20xf32> to vector<128x20xf32>
    %71 = arith.addf %68, %70 : vector<128x20xf32>
    %72 = arith.addf %71, %65 : vector<128x20xf32>
    %c0_37 = arith.constant 0 : index
    %c0_38 = arith.constant 0 : index
    %73 = vector.load %arg10[%c0_37, %c0_38] : memref<128x20xf32, #tpu.memory_space<vmem>>, vector<128x20xf32>
    tpu.vector_store %arg10[%c0_37, %c0_38], %72 {strides = array<i32>} : memref<128x20xf32, #tpu.memory_space<vmem>>, vector<128x20xf32>,
    return
  }
  func.func @transform_0(%arg0: i32) -> (i32, i32) {
    %c0_i32 = arith.constant 0 : i32
    %c0_i32_0 = arith.constant 0 : i32
    return %arg0, %c0_i32 : i32, i32
  }
  func.func @transform_1(%arg0: i32) -> (i32, i32) {
    %c0_i32 = arith.constant 0 : i32
    %c0_i32_0 = arith.constant 0 : i32
    %c0_i32_1 = arith.constant 0 : i32
    return %c0_i32, %c0_i32_0 : i32, i32
  }
  func.func @transform_2(%arg0: i32) -> (i32, i32) {
    %c0_i32 = arith.constant 0 : i32
    %c0_i32_0 = arith.constant 0 : i32
    %c0_i32_1 = arith.constant 0 : i32
    return %c0_i32, %c0_i32_0 : i32, i32
  }
  func.func @transform_3(%arg0: i32) -> (i32, i32) {
    %c0_i32 = arith.constant 0 : i32
    %c0_i32_0 = arith.constant 0 : i32
    return %arg0, %c0_i32 : i32, i32
  }
  func.func @transform_4(%arg0: i32) -> (i32, i32) {
    %c0_i32 = arith.constant 0 : i32
    %c0_i32_0 = arith.constant 0 : i32
    return %arg0, %c0_i32 : i32, i32
  }
  func.func @transform_5(%arg0: i32) -> (i32, i32) {
    %c0_i32 = arith.constant 0 : i32
    %c0_i32_0 = arith.constant 0 : i32
    %c0_i32_1 = arith.constant 0 : i32
    return %c0_i32, %c0_i32_0 : i32, i32
  }
  func.func @transform_6(%arg0: i32) -> (i32, i32) {
    %c0_i32 = arith.constant 0 : i32
    %c0_i32_0 = arith.constant 0 : i32
    %c0_i32_1 = arith.constant 0 : i32
    return %c0_i32, %c0_i32_0 : i32, i32
  }
  func.func @transform_7(%arg0: i32) -> (i32, i32) {
    %c0_i32 = arith.constant 0 : i32
    %c0_i32_0 = arith.constant 0 : i32
    return %arg0, %c0_i32 : i32, i32
  }
  func.func @transform_8(%arg0: i32) -> (i32, i32) {
    %c0_i32 = arith.constant 0 : i32
    %c0_i32_0 = arith.constant 0 : i32
    return %arg0, %c0_i32 : i32, i32
  }
  func.func @transform_9(%arg0: i32) -> (i32, i32) {
    %c0_i32 = arith.constant 0 : i32
    %c0_i32_0 = arith.constant 0 : i32
    return %arg0, %c0_i32 : i32, i32
  }
}

</mosaic_0001>

<llo_original>
// kernel: tpu_custom_call.1
$region0: #{tpu_custom_call.1}
  #allocation0 [shape = 'u32[]', space=smem, size = 0x4, offset = 0x4, fixed_abs, tag = 'smem constant byte address 0x4 - core index']
  #allocation1 [shape = 'u32[144,128]{1,0:T(1,128)}', space=vmem, size = 0x12000, scoped, tag = 'internal scratch']
  %s0 = inlined_call_operand.vmem [shape: f32[256,128], index: 0, kind: input, shape index: {}]
  %s1 = inlined_call_operand.vmem [shape: bf16[128,128], index: 1, kind: input, shape index: {}]
  %s2 = inlined_call_operand.vmem [shape: f32[1,128], index: 2, kind: input, shape index: {}]
  %s3 = inlined_call_operand.hbm [shape: f32[256,128], index: 3, kind: input, shape index: {}]
  %s4 = inlined_call_operand.hbm [shape: f32[256,128], index: 4, kind: input, shape index: {}]
  %s5 = inlined_call_operand.vmem [shape: bf16[128,20], index: 5, kind: input, shape index: {}]
  %s6 = inlined_call_operand.vmem [shape: f32[1,20], index: 6, kind: input, shape index: {}]
  %s7 = inlined_call_operand.vmem [shape: f32[256,20], index: 7, kind: input, shape index: {}]
  %s8 = inlined_call_operand.hbm [shape: f32[256,128], index: 8, kind: input, shape index: {}]
  %s9 = inlined_call_operand.vmem [shape: f32[256,20], index: 9, kind: output, shape index: {}]
  %s10 = sld [smem:[#allocation0]]
  $region81: #{tpu_custom_call.1} parent=0
    _
  %s12 = ssub.s32 1, %s10
  %s13 = scalar_select 0, %s12, %s10
  $region1: #{tpu_custom_call.1} parent=0
    #allocation2 [shape = 'u8[131072]{0}', space=vmem, size = 0x20000, scoped, tag = 'input window, operand 3']
    #allocation3 [shape = 's32[2]{0}', space=sflag, size = 0x8, scoped, tag = 'scoped memory for tpu_custom_call.1']
    #allocation4 [shape = 'u8[131072]{0}', space=vmem, size = 0x20000, scoped, tag = 'input window, operand 4']
    #allocation5 [shape = 's32[2]{0}', space=sflag, size = 0x8, scoped, tag = 'scoped memory for tpu_custom_call.1']
    #allocation6 [shape = 'u8[131072]{0}', space=vmem, size = 0x20000, scoped, tag = 'input window, operand 8']
    %14 = vsyncpa [#allocation3], 0
    %s15 = scalar_lea.sflag [#allocation3], 1
    %16 = vsyncpa %s15, 0
    %17 = vsyncpa [#allocation5], 0
    %s18 = scalar_lea.sflag [#allocation5], 1
    %19 = vsyncpa %s18, 0
    loop: start=0, step=1, limit=4
    $region2: #{tpu_custom_call.1} parent=1 // loop_pre_header
      _
    $region3: #{tpu_custom_call.1} parent=1 // loop_header
      %s21 = sphi 0, %s25
      %p22 = scmp.ge.s32.totalorder %s21, 4
      %s31 = sphi 0, %s33
      %s34 = sphi 0, %s31
      %s35 = sphi 0, %s34
      %s51 = sphi 0, %s35
      %s55 = sphi 0, %s55
      %s57 = sphi 0, %s55
      %s58 = sphi 0, %s57
      %s72 = sphi 0, %s58
      %s76 = sphi 0, %s76
      %s78 = sphi 0, %s76
      %s79 = sphi 0, %s78
      %s93 = sphi 0, %s79
      %s99 = sphi 0, %s101
      %s102 = sphi 0, %s99
      %s103 = sphi 0, %s102
      %s119 = sphi 0, %s103
      %s125 = sphi 0, %s127
      %s128 = sphi 0, %s125
      %s129 = sphi 0, %s128
      %s145 = sphi 0, %s129
      %s149 = sphi 0, %s149
      %s151 = sphi 0, %s149
      %s152 = sphi 0, %s151
      %s166 = sphi 0, %s152
      %s170 = sphi 0, %s170
      %s172 = sphi 0, %s170
      %s173 = sphi 0, %s172
      %s187 = sphi 0, %s173
      %s193 = sphi 0, %s195
      %s196 = sphi 0, %s193
      %s197 = sphi 0, %s196
      %s213 = sphi 0, %s197
      %s219 = sphi 0, %s221
      %s222 = sphi 0, %s219
      %s223 = sphi 0, %s222
      %s239 = sphi 0, %s223
      %s245 = sphi 0, %s247
      %s248 = sphi 0, %s245
      %s249 = sphi 0, %s248
      %s265 = sphi 0, %s249
    $region4: #{tpu_custom_call.1} parent=1 // loop_header_branch
      %24 = sbr.rel (%p22) target = $region8
    $region5: #{tpu_custom_call.1} parent=1 // loop_body
      %s26 = ssub.s32 %s21, 1
      %s27 = ssub.s32 %s21, 2
      %s28 = sadd.s32 %s21, 1
      %s29 = ssub.s32 %s21, %s28
      %p30 = scmp.eq.s32.totalorder %s29, 0
      %s32 = sadd.s32 %s31, 1
      %s33 = scalar_select %p30, %s31, %s32
      %p36 = pneg %p30
      %p37 = scmp.eq.s32.totalorder %s21, 1
      %p38 = por %p36, %p37
      %p39 = scmp.ne.s32.totalorder %s31, %s34
      %p40 = scmp.eq.s32.totalorder %s21, 0
      %p41 = por %p39, %p40
      %p42 = scmp.ne.s32.totalorder %s31, %s34
      %p43 = scmp.eq.s32.totalorder %s26, 1
      %p44 = por %p42, %p43
      %p45 = scmp.ne.s32.totalorder %s34, %s35
      %p46 = scmp.eq.s32.totalorder %s26, 0
      %p47 = por %p45, %p46
      %p48 = scmp.ne.s32.totalorder %s34, %s35
      %p49 = scmp.eq.s32.totalorder %s27, 1
      %p50 = por %p48, %p49
      %p52 = scmp.ne.s32.totalorder %s35, %s51
      %p53 = scmp.eq.s32.totalorder %s27, 0
      %p54 = por %p52, %p53
      %s56 = sadd.s32 %s55, 1
      %p59 = scmp.eq.s32.totalorder %s21, 1
      %p60 = scmp.ne.s32.totalorder %s55, %s57
      %p61 = scmp.eq.s32.totalorder %s21, 0
      %p62 = por %p60, %p61
      %p63 = scmp.ne.s32.totalorder %s55, %s57
      %p64 = scmp.eq.s32.totalorder %s26, 1
      %p65 = por %p63, %p64
      %p66 = scmp.ne.s32.totalorder %s57, %s58
      %p67 = scmp.eq.s32.totalorder %s26, 0
      %p68 = por %p66, %p67
      %p69 = scmp.ne.s32.totalorder %s57, %s58
      %p70 = scmp.eq.s32.totalorder %s27, 1
      %p71 = por %p69, %p70
      %p73 = scmp.ne.s32.totalorder %s58, %s72
      %p74 = scmp.eq.s32.totalorder %s27, 0
      %p75 = por %p73, %p74
      %s77 = sadd.s32 %s76, 1
      %p80 = scmp.eq.s32.totalorder %s21, 1
      %p81 = scmp.ne.s32.totalorder %s76, %s78
      %p82 = scmp.eq.s32.totalorder %s21, 0
      %p83 = por %p81, %p82
      %p84 = scmp.ne.s32.totalorder %s76, %s78
      %p85 = scmp.eq.s32.totalorder %s26, 1
      %p86 = por %p84, %p85
      %p87 = scmp.ne.s32.totalorder %s78, %s79
      %p88 = scmp.eq.s32.totalorder %s26, 0
      %p89 = por %p87, %p88
      %p90 = scmp.ne.s32.totalorder %s78, %s79
      %p91 = scmp.eq.s32.totalorder %s27, 1
      %p92 = por %p90, %p91
      %p94 = scmp.ne.s32.totalorder %s79, %s93
      %p95 = scmp.eq.s32.totalorder %s27, 0
      %p96 = por %p94, %p95
      %s97 = ssub.s32 %s21, %s28
      %p98 = scmp.eq.s32.totalorder %s97, 0
      %s100 = sadd.s32 %s99, 1
      %s101 = scalar_select %p98, %s99, %s100
      %p104 = pneg %p98
      %p105 = scmp.eq.s32.totalorder %s21, 1
      %p106 = por %p104, %p105
      %p107 = scmp.ne.s32.totalorder %s99, %s102
      %p108 = scmp.eq.s32.totalorder %s21, 0
      %p109 = por %p107, %p108
      %p110 = scmp.ne.s32.totalorder %s99, %s102
      %p111 = scmp.eq.s32.totalorder %s26, 1
      %p112 = por %p110, %p111
      %p113 = scmp.ne.s32.totalorder %s102, %s103
      %p114 = scmp.eq.s32.totalorder %s26, 0
      %p115 = por %p113, %p114
      %p116 = scmp.ne.s32.totalorder %s102, %s103
      %p117 = scmp.eq.s32.totalorder %s27, 1
      %p118 = por %p116, %p117
      %p120 = scmp.ne.s32.totalorder %s103, %s119
      %p121 = scmp.eq.s32.totalorder %s27, 0
      %p122 = por %p120, %p121
      %s123 = ssub.s32 %s21, %s28
      %p124 = scmp.eq.s32.totalorder %s123, 0
      %s126 = sadd.s32 %s125, 1
      %s127 = scalar_select %p124, %s125, %s126
      %p130 = pneg %p124
      %p131 = scmp.eq.s32.totalorder %s21, 1
      %p132 = por %p130, %p131
      %p133 = scmp.ne.s32.totalorder %s125, %s128
      %p134 = scmp.eq.s32.totalorder %s21, 0
      %p135 = por %p133, %p134
      %p136 = scmp.ne.s32.totalorder %s125, %s128
      %p137 = scmp.eq.s32.totalorder %s26, 1
      %p138 = por %p136, %p137
      %p139 = scmp.ne.s32.totalorder %s128, %s129
      %p140 = scmp.eq.s32.totalorder %s26, 0
      %p141 = por %p139, %p140
      %p142 = scmp.ne.s32.totalorder %s128, %s129
      %p143 = scmp.eq.s32.totalorder %s27, 1
      %p144 = por %p142, %p143
      %p146 = scmp.ne.s32.totalorder %s129, %s145
      %p147 = scmp.eq.s32.totalorder %s27, 0
      %p148 = por %p146, %p147
      %s150 = sadd.s32 %s149, 1
      %p153 = scmp.eq.s32.totalorder %s21, 1
      %p154 = scmp.ne.s32.totalorder %s149, %s151
      %p155 = scmp.eq.s32.totalorder %s21, 0
      %p156 = por %p154, %p155
      %p157 = scmp.ne.s32.totalorder %s149, %s151
      %p158 = scmp.eq.s32.totalorder %s26, 1
      %p159 = por %p157, %p158
      %p160 = scmp.ne.s32.totalorder %s151, %s152
      %p161 = scmp.eq.s32.totalorder %s26, 0
      %p162 = por %p160, %p161
      %p163 = scmp.ne.s32.totalorder %s151, %s152
      %p164 = scmp.eq.s32.totalorder %s27, 1
      %p165 = por %p163, %p164
      %p167 = scmp.ne.s32.totalorder %s152, %s166
      %p168 = scmp.eq.s32.totalorder %s27, 0
      %p169 = por %p167, %p168
      %s171 = sadd.s32 %s170, 1
      %p174 = scmp.eq.s32.totalorder %s21, 1
      %p175 = scmp.ne.s32.totalorder %s170, %s172
      %p176 = scmp.eq.s32.totalorder %s21, 0
      %p177 = por %p175, %p176
      %p178 = scmp.ne.s32.totalorder %s170, %s172
      %p179 = scmp.eq.s32.totalorder %s26, 1
      %p180 = por %p178, %p179
      %p181 = scmp.ne.s32.totalorder %s172, %s173
      %p182 = scmp.eq.s32.totalorder %s26, 0
      %p183 = por %p181, %p182
      %p184 = scmp.ne.s32.totalorder %s172, %s173
      %p185 = scmp.eq.s32.totalorder %s27, 1
      %p186 = por %p184, %p185
      %p188 = scmp.ne.s32.totalorder %s173, %s187
      %p189 = scmp.eq.s32.totalorder %s27, 0
      %p190 = por %p188, %p189
      %s191 = ssub.s32 %s21, %s28
      %p192 = scmp.eq.s32.totalorder %s191, 0
      %s194 = sadd.s32 %s193, 1
      %s195 = scalar_select %p192, %s193, %s194
      %p198 = pneg %p192
      %p199 = scmp.eq.s32.totalorder %s21, 1
      %p200 = por %p198, %p199
      %p201 = scmp.ne.s32.totalorder %s193, %s196
      %p202 = scmp.eq.s32.totalorder %s21, 0
      %p203 = por %p201, %p202
      %p204 = scmp.ne.s32.totalorder %s193, %s196
      %p205 = scmp.eq.s32.totalorder %s26, 1
      %p206 = por %p204, %p205
      %p207 = scmp.ne.s32.totalorder %s196, %s197
      %p208 = scmp.eq.s32.totalorder %s26, 0
      %p209 = por %p207, %p208
      %p210 = scmp.ne.s32.totalorder %s196, %s197
      %p211 = scmp.eq.s32.totalorder %s27, 1
      %p212 = por %p210, %p211
      %p214 = scmp.ne.s32.totalorder %s197, %s213
      %p215 = scmp.eq.s32.totalorder %s27, 0
      %p216 = por %p214, %p215
      %s217 = ssub.s32 %s21, %s28
      %p218 = scmp.eq.s32.totalorder %s217, 0
      %s220 = sadd.s32 %s219, 1
      %s221 = scalar_select %p218, %s219, %s220
      %p224 = pneg %p218
      %p225 = scmp.eq.s32.totalorder %s21, 1
      %p226 = por %p224, %p225
      %p227 = scmp.ne.s32.totalorder %s219, %s222
      %p228 = scmp.eq.s32.totalorder %s21, 0
      %p229 = por %p227, %p228
      %p230 = scmp.ne.s32.totalorder %s219, %s222
      %p231 = scmp.eq.s32.totalorder %s26, 1
      %p232 = por %p230, %p231
      %p233 = scmp.ne.s32.totalorder %s222, %s223
      %p234 = scmp.eq.s32.totalorder %s26, 0
      %p235 = por %p233, %p234
      %p236 = scmp.ne.s32.totalorder %s222, %s223
      %p237 = scmp.eq.s32.totalorder %s27, 1
      %p238 = por %p236, %p237
      %p240 = scmp.ne.s32.totalorder %s223, %s239
      %p241 = scmp.eq.s32.totalorder %s27, 0
      %p242 = por %p240, %p241
      %s243 = ssub.s32 %s21, %s28
      %p244 = scmp.eq.s32.totalorder %s243, 0
      %s246 = sadd.s32 %s245, 1
      %s247 = scalar_select %p244, %s245, %s246
      %p250 = pneg %p244
      %p251 = scmp.eq.s32.totalorder %s21, 1
      %p252 = por %p250, %p251
      %p253 = scmp.ne.s32.totalorder %s245, %s248
      %p254 = scmp.eq.s32.totalorder %s21, 0
      %p255 = por %p253, %p254
      %p256 = scmp.ne.s32.totalorder %s245, %s248
      %p257 = scmp.eq.s32.totalorder %s26, 1
      %p258 = por %p256, %p257
      %p259 = scmp.ne.s32.totalorder %s248, %s249
      %p260 = scmp.eq.s32.totalorder %s26, 0
      %p261 = por %p259, %p260
      %p262 = scmp.ne.s32.totalorder %s248, %s249
      %p263 = scmp.eq.s32.totalorder %s27, 1
      %p264 = por %p262, %p263
      %p266 = scmp.ne.s32.totalorder %s249, %s265
      %p267 = scmp.eq.s32.totalorder %s27, 0
      %p268 = por %p266, %p267
      %p269 = scmp.le.s32.totalorder 1, %s21
      %p270 = scmp.lt.s32.totalorder %s21, 3
      %p271 = pnand %p269, %p270
      %p272 = pneg %p271
      // Predicated region
      $region9: #{tpu_custom_call.1} parent=5 // pred_check
        _
      $region10: #{tpu_custom_call.1} parent=5 // pred_check_branch
        %274 = sbr.rel (%p271) target = $region12
      $region11: #{tpu_custom_call.1} parent=5 // pred_region
        %s275 = ssub.s32 %s21, 1
        // Predicated region
        $region13: #{tpu_custom_call.1} parent=11 // pred_check
          %p276 = pneg %p68
        $region14: #{tpu_custom_call.1} parent=11 // pred_check_branch
          %278 = sbr.rel (%p276) target = $region16
        $region15: #{tpu_custom_call.1} parent=11 // pred_region
          _
        $region16: #{tpu_custom_call.1} parent=11 // pred_fallthru
          _
        // Predicated region
        $region17: #{tpu_custom_call.1} parent=11 // pred_check
          %p279 = pneg %p89
        $region18: #{tpu_custom_call.1} parent=11 // pred_check_branch
          %281 = sbr.rel (%p279) target = $region20
        $region19: #{tpu_custom_call.1} parent=11 // pred_region
          _
        $region20: #{tpu_custom_call.1} parent=11 // pred_fallthru
          _
        // Predicated region
        $region21: #{tpu_custom_call.1} parent=11 // pred_check
          %p282 = pneg %p162
        $region22: #{tpu_custom_call.1} parent=11 // pred_check_branch
          %284 = sbr.rel (%p282) target = $region24
        $region23: #{tpu_custom_call.1} parent=11 // pred_region
          _
        $region24: #{tpu_custom_call.1} parent=11 // pred_fallthru
          _
        // Predicated region
        $region25: #{tpu_custom_call.1} parent=11 // pred_check
          %p285 = pneg %p183
        $region26: #{tpu_custom_call.1} parent=11 // pred_check_branch
          %287 = sbr.rel (%p285) target = $region28
        $region27: #{tpu_custom_call.1} parent=11 // pred_region
          _
        $region28: #{tpu_custom_call.1} parent=11 // pred_fallthru
          _
      $region12: #{tpu_custom_call.1} parent=5 // pred_fallthru
        _
      %p288 = scmp.lt.s32.totalorder %s21, 2
      // Predicated region
      $region29: #{tpu_custom_call.1} parent=5 // pred_check
        %p289 = pneg %p288
      $region30: #{tpu_custom_call.1} parent=5 // pred_check_branch
        %291 = sbr.rel (%p289) target = $region32
      $region31: #{tpu_custom_call.1} parent=5 // pred_region
        // Predicated region
        $region33: #{tpu_custom_call.1} parent=31 // pred_check
          %p292 = pneg %p41
        $region34: #{tpu_custom_call.1} parent=31 // pred_check_branch
          %294 = sbr.rel (%p292) target = $region36
        $region35: #{tpu_custom_call.1} parent=31 // pred_region
          %s295 = smul.u32 16, %s21
          %p296 = scmp.lt.s32.totalorder %s295, 31
          %s297 = scalar_select %p296, %s295, 31
          %s298 = smul.addr %s297, 8
          %s299 = scalar_lea.vmem %s0, %s298
          %s300 = smul.u32 16, %s21
        $region36: #{tpu_custom_call.1} parent=31 // pred_fallthru
          _
        // Predicated region
        $region37: #{tpu_custom_call.1} parent=31 // pred_check
          %p301 = pneg %p109
        $region38: #{tpu_custom_call.1} parent=31 // pred_check_branch
          %303 = sbr.rel (%p301) target = $region40
        $region39: #{tpu_custom_call.1} parent=31 // pred_region
          %s304 = sand.u32 %s99, 1
          %s305 = scalar_lea.sflag [#allocation3], %s304
          %s306 = sand.u32 %s99, 1
          %s307 = smul.addr %s306, 128
          %s308 = scalar_lea.vmem [#allocation2], %s307
          %s309 = smul.u32 16, %s21
          %s311 = ssub.s32 2048, 2048
          %312 = vsyncadd %s305, %s311
          %s313 = smul.addr %s309, 128
          %s314 = scalar_lea.hbm %s3, %s313
          %s315 = sshll.u32 %s308, 4
          %s316 = int_to_ptr.vmem [resolvable:$true] %s315
          %321 = dma.hbm_to_vmem [thread:$0]  %s314, 2048, %s316, %s305, 128, 128, 8
        $region40: #{tpu_custom_call.1} parent=31 // pred_fallthru
          _
        // Predicated region
        $region41: #{tpu_custom_call.1} parent=31 // pred_check
          %p322 = pneg %p135
        $region42: #{tpu_custom_call.1} parent=31 // pred_check_branch
          %324 = sbr.rel (%p322) target = $region44
        $region43: #{tpu_custom_call.1} parent=31 // pred_region
          %s325 = sand.u32 %s21, 1
          %s326 = scalar_lea.sflag [#allocation5], %s325
          %s327 = sand.u32 %s125, 1
          %s328 = smul.addr %s327, 128
          %s329 = scalar_lea.vmem [#allocation4], %s328
          %s330 = smul.u32 16, %s21
          %s332 = ssub.s32 2048, 2048
          %333 = vsyncadd %s326, %s332
          %s334 = smul.addr %s330, 128
          %s335 = scalar_lea.hbm %s4, %s334
          %s336 = sshll.u32 %s329, 4
          %s337 = int_to_ptr.vmem [resolvable:$true] %s336
          %342 = dma.hbm_to_vmem [thread:$0]  %s335, 2048, %s337, %s326, 128, 128, 8
        $region44: #{tpu_custom_call.1} parent=31 // pred_fallthru
          _
        // Predicated region
        $region45: #{tpu_custom_call.1} parent=31 // pred_check
          %p343 = pneg %p203
        $region46: #{tpu_custom_call.1} parent=31 // pred_check_branch
          %345 = sbr.rel (%p343) target = $region48
        $region47: #{tpu_custom_call.1} parent=31 // pred_region
          %s346 = smul.u32 16, %s21
          %p347 = scmp.lt.s32.totalorder %s346, 31
          %s348 = scalar_select %p347, %s346, 31
          %s349 = smul.addr %s348, 8
          %s350 = scalar_lea.vmem %s7, %s349
          %s351 = smul.u32 16, %s21
        $region48: #{tpu_custom_call.1} parent=31 // pred_fallthru
          _
        // Predicated region
        $region49: #{tpu_custom_call.1} parent=31 // pred_check
          %p352 = pneg %p229
        $region50: #{tpu_custom_call.1} parent=31 // pred_check_branch
          %354 = sbr.rel (%p352) target = $region52
        $region51: #{tpu_custom_call.1} parent=31 // pred_region
          %s355 = sand.u32 %s21, 1
          %s356 = scalar_lea.sflag [#allocation5], %s355
          %s357 = sand.u32 %s219, 1
          %s358 = smul.addr %s357, 128
          %s359 = scalar_lea.vmem [#allocation6], %s358
          %s360 = smul.u32 16, %s21
          %s362 = ssub.s32 2048, 2048
          %363 = vsyncadd %s356, %s362
          %s364 = smul.addr %s360, 128
          %s365 = scalar_lea.hbm %s8, %s364
          %s366 = sshll.u32 %s359, 4
          %s367 = int_to_ptr.vmem [resolvable:$true] %s366
          %372 = dma.hbm_to_vmem [thread:$0]  %s365, 2048, %s367, %s356, 128, 128, 8
        $region52: #{tpu_custom_call.1} parent=31 // pred_fallthru
          _
      $region32: #{tpu_custom_call.1} parent=5 // pred_fallthru
        _
      %p373 = scmp.le.s32.totalorder 1, %s21
      %p374 = scmp.lt.s32.totalorder %s21, 3
      %p375 = pnand %p373, %p374
      %p376 = pneg %p375
      // Predicated region
      $region53: #{tpu_custom_call.1} parent=5 // pred_check
        _
      $region54: #{tpu_custom_call.1} parent=5 // pred_check_branch
        %378 = sbr.rel (%p375) target = $region56
      $region55: #{tpu_custom_call.1} parent=5 // pred_region
        %s379 = ssub.s32 %s21, 1
        %s380 = sand.u32 %s102, 1
        %s381 = scalar_lea.sflag [#allocation3], %s380
        %s382 = sand.u32 %s102, 1
        %s383 = smul.addr %s382, 128
        %s384 = scalar_lea.vmem [#allocation2], %s383
        // Predicated region
        $region57: #{tpu_custom_call.1} parent=55 // pred_check
          %p385 = pneg %p115
        $region58: #{tpu_custom_call.1} parent=55 // pred_check_branch
          %387 = sbr.rel (%p385) target = $region60
        $region59: #{tpu_custom_call.1} parent=55 // pred_region
          %388 = dma.done %s381, 2048
        $region60: #{tpu_custom_call.1} parent=55 // pred_fallthru
          _
        %s389 = sand.u32 %s26, 1
        %s390 = scalar_lea.sflag [#allocation5], %s389
        %s391 = sand.u32 %s128, 1
        %s392 = smul.addr %s391, 128
        %s393 = scalar_lea.vmem [#allocation4], %s392
        // Predicated region
        $region61: #{tpu_custom_call.1} parent=55 // pred_check
          %p394 = pneg %p141
        $region62: #{tpu_custom_call.1} parent=55 // pred_check_branch
          %396 = sbr.rel (%p394) target = $region64
        $region63: #{tpu_custom_call.1} parent=55 // pred_region
          %397 = dma.done %s390, 2048
        $region64: #{tpu_custom_call.1} parent=55 // pred_fallthru
          _
        %s398 = sand.u32 %s26, 1
        %s399 = scalar_lea.sflag [#allocation5], %s398
        %s400 = sand.u32 %s222, 1
        %s401 = smul.addr %s400, 128
        %s402 = scalar_lea.vmem [#allocation6], %s401
        // Predicated region
        $region65: #{tpu_custom_call.1} parent=55 // pred_check
          %p403 = pneg %p235
        $region66: #{tpu_custom_call.1} parent=55 // pred_check_branch
          %405 = sbr.rel (%p403) target = $region68
        $region67: #{tpu_custom_call.1} parent=55 // pred_region
          %406 = dma.done %s399, 2048
        $region68: #{tpu_custom_call.1} parent=55 // pred_fallthru
          _
        %s407 = smul.u32 16, %s26
        %p408 = scmp.lt.s32.totalorder %s407, 31
        %s409 = scalar_select %p408, %s407, 31
        %s410 = smul.addr %s409, 8
        %s411 = scalar_lea.vmem %s0, %s410
        %p412 = pneg %p47
        %p413 = pneg %p44
        %p414 = pneg %p68
        %p415 = pneg %p65
        %p416 = pneg %p89
        %p417 = pneg %p86
        %s418 = sand.u32 %s102, 1
        %s419 = scalar_lea.sflag [#allocation3], %s418
        %s420 = sand.u32 %s102, 1
        %s421 = smul.addr %s420, 128
        %s422 = scalar_lea.vmem [#allocation2], %s421
        %p423 = pneg %p115
        %p424 = pneg %p112
        %s425 = sand.u32 %s26, 1
        %s426 = scalar_lea.sflag [#allocation5], %s425
        %s427 = sand.u32 %s128, 1
        %s428 = smul.addr %s427, 128
        %s429 = scalar_lea.vmem [#allocation4], %s428
        %p430 = pneg %p141
        %p431 = pneg %p138
        %p432 = pneg %p162
        %p433 = pneg %p159
        %p434 = pneg %p183
        %p435 = pneg %p180
        %s436 = smul.u32 16, %s26
        %p437 = scmp.lt.s32.totalorder %s436, 31
        %s438 = scalar_select %p437, %s436, 31
        %s439 = smul.addr %s438, 8
        %s440 = scalar_lea.vmem %s7, %s439
        %p441 = pneg %p209
        %p442 = pneg %p206
        %s443 = sand.u32 %s26, 1
        %s444 = scalar_lea.sflag [#allocation5], %s443
        %s445 = sand.u32 %s222, 1
        %s446 = smul.addr %s445, 128
        %s447 = scalar_lea.vmem [#allocation6], %s446
        %p448 = pneg %p235
        %p449 = pneg %p232
        %p450 = pneg %p261
        %p451 = pneg %p258
        %s452 = smul.u32 16, %s26
        %p453 = scmp.lt.s32.totalorder %s452, 31
        %s454 = scalar_select %p453, %s452, 31
        %s455 = smul.addr %s454, 8
        %s456 = scalar_lea.vmem %s9, %s455
        %s457 = smul.u32 16, %s26
        %p458 = scmp.lt.s32.totalorder %s457, 31
        %s459 = scalar_select %p458, %s457, 31
        %s460 = smul.addr %s459, 8
        %s461 = scalar_lea.vmem %s0, %s460
        %s462 = smul.u32 16, %s26
        %s463 = smul.u32 16, %s26
        %s464 = smul.u32 16, %s26
        %s465 = smul.u32 16, %s26
        %p466 = scmp.lt.s32.totalorder %s465, 31
        %s467 = scalar_select %p466, %s465, 31
        %s468 = smul.addr %s467, 8
        %s469 = scalar_lea.vmem %s7, %s468
        %s470 = smul.u32 16, %s26
        %s471 = smul.u32 16, %s26
        %s472 = smul.u32 16, %s26
        %p473 = scmp.lt.s32.totalorder %s472, 31
        %s474 = scalar_select %p473, %s472, 31
        %s475 = smul.addr %s474, 8
        %s476 = scalar_lea.vmem %s9, %s475
        %s477 = smul.u32 16, %s26
        %v479 = vld [vmem:[%s461] sm:$0xff]
        %v480 = vld [vmem:[%s461 + $0x8] sm:$0xff]
        %v481 = vld [vmem:[%s461 + $0x10] sm:$0xff]
        %v482 = vld [vmem:[%s461 + $0x18] sm:$0xff]
        %v483 = vld [vmem:[%s461 + $0x20] sm:$0xff]
        %v484 = vld [vmem:[%s461 + $0x28] sm:$0xff]
        %v485 = vld [vmem:[%s461 + $0x30] sm:$0xff]
        %v486 = vld [vmem:[%s461 + $0x38] sm:$0xff]
        %v487 = vld [vmem:[%s461 + $0x40] sm:$0xff]
        %v488 = vld [vmem:[%s461 + $0x48] sm:$0xff]
        %v489 = vld [vmem:[%s461 + $0x50] sm:$0xff]
        %v490 = vld [vmem:[%s461 + $0x58] sm:$0xff]
        %v491 = vld [vmem:[%s461 + $0x60] sm:$0xff]
        %v492 = vld [vmem:[%s461 + $0x68] sm:$0xff]
        %v493 = vld [vmem:[%s461 + $0x70] sm:$0xff]
        %v494 = vld [vmem:[%s461 + $0x78] sm:$0xff]
        %v495 = vld [vmem:[%s384] sm:$0xff]
        %v496 = vld [vmem:[%s384 + $0x8] sm:$0xff]
        %v497 = vld [vmem:[%s384 + $0x10] sm:$0xff]
        %v498 = vld [vmem:[%s384 + $0x18] sm:$0xff]
        %v499 = vld [vmem:[%s384 + $0x20] sm:$0xff]
        %v500 = vld [vmem:[%s384 + $0x28] sm:$0xff]
        %v501 = vld [vmem:[%s384 + $0x30] sm:$0xff]
        %v502 = vld [vmem:[%s384 + $0x38] sm:$0xff]
        %v503 = vld [vmem:[%s384 + $0x40] sm:$0xff]
        %v504 = vld [vmem:[%s384 + $0x48] sm:$0xff]
        %v505 = vld [vmem:[%s384 + $0x50] sm:$0xff]
        %v506 = vld [vmem:[%s384 + $0x58] sm:$0xff]
        %v507 = vld [vmem:[%s384 + $0x60] sm:$0xff]
        %v508 = vld [vmem:[%s384 + $0x68] sm:$0xff]
        %v509 = vld [vmem:[%s384 + $0x70] sm:$0xff]
        %v510 = vld [vmem:[%s384 + $0x78] sm:$0xff]
        %v511 = vld [vmem:[%s393] sm:$0xff]
        %v512 = vld [vmem:[%s393 + $0x8] sm:$0xff]
        %v513 = vld [vmem:[%s393 + $0x10] sm:$0xff]
        %v514 = vld [vmem:[%s393 + $0x18] sm:$0xff]
        %v515 = vld [vmem:[%s393 + $0x20] sm:$0xff]
        %v516 = vld [vmem:[%s393 + $0x28] sm:$0xff]
        %v517 = vld [vmem:[%s393 + $0x30] sm:$0xff]
        %v518 = vld [vmem:[%s393 + $0x38] sm:$0xff]
        %v519 = vld [vmem:[%s393 + $0x40] sm:$0xff]
        %v520 = vld [vmem:[%s393 + $0x48] sm:$0xff]
        %v521 = vld [vmem:[%s393 + $0x50] sm:$0xff]
        %v522 = vld [vmem:[%s393 + $0x58] sm:$0xff]
        %v523 = vld [vmem:[%s393 + $0x60] sm:$0xff]
        %v524 = vld [vmem:[%s393 + $0x68] sm:$0xff]
        %v525 = vld [vmem:[%s393 + $0x70] sm:$0xff]
        %v526 = vld [vmem:[%s393 + $0x78] sm:$0xff]
        %v527 = vmul.f32 %v511, %v479
        %v528 = vmul.f32 %v512, %v480
        %v529 = vmul.f32 %v513, %v481
        %v530 = vmul.f32 %v514, %v482
        %v531 = vmul.f32 %v515, %v483
        %v532 = vmul.f32 %v516, %v484
        %v533 = vmul.f32 %v517, %v485
        %v534 = vmul.f32 %v518, %v486
        %v535 = vmul.f32 %v519, %v487
        %v536 = vmul.f32 %v520, %v488
        %v537 = vmul.f32 %v521, %v489
        %v538 = vmul.f32 %v522, %v490
        %v539 = vmul.f32 %v523, %v491
        %v540 = vmul.f32 %v524, %v492
        %v541 = vmul.f32 %v525, %v493
        %v542 = vmul.f32 %v526, %v494
        %543 = vadd.xlane.f32.xlu0 %v527
        %v544 = vpop.xlane.xlu0 %543
        %545 = vadd.xlane.f32.xlu0 %v528
        %v546 = vpop.xlane.xlu0 %545
        %547 = vadd.xlane.f32.xlu0 %v529
        %v548 = vpop.xlane.xlu0 %547
        %549 = vadd.xlane.f32.xlu0 %v530
        %v550 = vpop.xlane.xlu0 %549
        %551 = vadd.xlane.f32.xlu0 %v531
        %v552 = vpop.xlane.xlu0 %551
        %553 = vadd.xlane.f32.xlu0 %v532
        %v554 = vpop.xlane.xlu0 %553
        %555 = vadd.xlane.f32.xlu0 %v533
        %v556 = vpop.xlane.xlu0 %555
        %557 = vadd.xlane.f32.xlu0 %v534
        %v558 = vpop.xlane.xlu0 %557
        %559 = vadd.xlane.f32.xlu0 %v535
        %v560 = vpop.xlane.xlu0 %559
        %561 = vadd.xlane.f32.xlu0 %v536
        %v562 = vpop.xlane.xlu0 %561
        %563 = vadd.xlane.f32.xlu0 %v537
        %v564 = vpop.xlane.xlu0 %563
        %565 = vadd.xlane.f32.xlu0 %v538
        %v566 = vpop.xlane.xlu0 %565
        %567 = vadd.xlane.f32.xlu0 %v539
        %v568 = vpop.xlane.xlu0 %567
        %569 = vadd.xlane.f32.xlu0 %v540
        %v570 = vpop.xlane.xlu0 %569
        %571 = vadd.xlane.f32.xlu0 %v541
        %v572 = vpop.xlane.xlu0 %571
        %573 = vadd.xlane.f32.xlu0 %v542
        %v574 = vpop.xlane.xlu0 %573
        %v575 = vmul.f32 %v544, 0.0078125
        %v576 = vmul.f32 %v546, 0.0078125
        %v577 = vmul.f32 %v548, 0.0078125
        %v578 = vmul.f32 %v550, 0.0078125
        %v579 = vmul.f32 %v552, 0.0078125
        %v580 = vmul.f32 %v554, 0.0078125
        %v581 = vmul.f32 %v556, 0.0078125
        %v582 = vmul.f32 %v558, 0.0078125
        %v583 = vmul.f32 %v560, 0.0078125
        %v584 = vmul.f32 %v562, 0.0078125
        %v585 = vmul.f32 %v564, 0.0078125
        %v586 = vmul.f32 %v566, 0.0078125
        %v587 = vmul.f32 %v568, 0.0078125
        %v588 = vmul.f32 %v570, 0.0078125
        %v589 = vmul.f32 %v572, 0.0078125
        %v590 = vmul.f32 %v574, 0.0078125
        %v591 = vmul.f32 %v495, %v575
        %v592 = vmul.f32 %v496, %v576
        %v593 = vmul.f32 %v497, %v577
        %v594 = vmul.f32 %v498, %v578
        %v595 = vmul.f32 %v499, %v579
        %v596 = vmul.f32 %v500, %v580
        %v597 = vmul.f32 %v501, %v581
        %v598 = vmul.f32 %v502, %v582
        %v599 = vmul.f32 %v503, %v583
        %v600 = vmul.f32 %v504, %v584
        %v601 = vmul.f32 %v505, %v585
        %v602 = vmul.f32 %v506, %v586
        %v603 = vmul.f32 %v507, %v587
        %v604 = vmul.f32 %v508, %v588
        %v605 = vmul.f32 %v509, %v589
        %v606 = vmul.f32 %v510, %v590
        %v607 = vpack.c.bf16 %v480, %v479
        %v608 = vpack.c.bf16 %v482, %v481
        %v609 = vpack.c.bf16 %v484, %v483
        %v610 = vpack.c.bf16 %v486, %v485
        %v611 = vpack.c.bf16 %v488, %v487
        %v612 = vpack.c.bf16 %v490, %v489
        %v613 = vpack.c.bf16 %v492, %v491
        %v614 = vpack.c.bf16 %v494, %v493
        %v615 = vld [vmem:[%s1] sm:$0xf]
        %v616 = vld [vmem:[%s1 + $0x4] sm:$0xf]
        %v617 = vld [vmem:[%s1 + $0x8] sm:$0xf]
        %v618 = vld [vmem:[%s1 + $0xc] sm:$0xf]
        %v619 = vld [vmem:[%s1 + $0x10] sm:$0xf]
        %v620 = vld [vmem:[%s1 + $0x14] sm:$0xf]
        %v621 = vld [vmem:[%s1 + $0x18] sm:$0xf]
        %v622 = vld [vmem:[%s1 + $0x1c] sm:$0xf]
        %v623 = vld [vmem:[%s1 + $0x20] sm:$0xf]
        %v624 = vld [vmem:[%s1 + $0x24] sm:$0xf]
        %v625 = vld [vmem:[%s1 + $0x28] sm:$0xf]
        %v626 = vld [vmem:[%s1 + $0x2c] sm:$0xf]
        %v627 = vld [vmem:[%s1 + $0x30] sm:$0xf]
        %v628 = vld [vmem:[%s1 + $0x34] sm:$0xf]
        %v629 = vld [vmem:[%s1 + $0x38] sm:$0xf]
        %v630 = vld [vmem:[%s1 + $0x3c] sm:$0xf]
        %v631 = vld [vmem:[%s2] sm:$0x1]
        %v633 = vlaneseq
        %v634 = vshrl.u32 %v633, 7
        %v635 = vsub.s32 0, %v634
        %v636 = vrot.slane %v631, %v635
        %v654 = vunpack.c.l.b16 %v615
        %v655 = vunpack.c.l.b16 %v616
        %v656 = vunpack.c.l.b16 %v617
        %v657 = vunpack.c.l.b16 %v618
        %v658 = vunpack.c.l.b16 %v619
        %v659 = vunpack.c.l.b16 %v620
        %v660 = vunpack.c.l.b16 %v621
        %v661 = vunpack.c.l.b16 %v622
        %v662 = vunpack.c.l.b16 %v623
        %v663 = vunpack.c.l.b16 %v624
        %v664 = vunpack.c.l.b16 %v625
        %v665 = vunpack.c.l.b16 %v626
        %v666 = vunpack.c.l.b16 %v627
        %v667 = vunpack.c.l.b16 %v628
        %v668 = vunpack.c.l.b16 %v629
        %v669 = vunpack.c.l.b16 %v630
        %v670 = vpack.c.b16 %v655, %v654
        %v671 = vpack.c.b16 %v657, %v656
        %v672 = vpack.c.b16 %v659, %v658
        %v673 = vpack.c.b16 %v661, %v660
        %v674 = vpack.c.b16 %v663, %v662
        %v675 = vpack.c.b16 %v665, %v664
        %v676 = vpack.c.b16 %v667, %v666
        %v677 = vpack.c.b16 %v669, %v668
        %686 = vmatprep.subr.bf16.mxu0 0
        %687 = vmatpush1.bf16.msra.mxu0 %v677
        %688 = vmatprep.subr.bf16.mxu0 0
        %689 = vmatpush1.bf16.msra.mxu0 %v676
        %690 = vmatprep.subr.bf16.mxu0 0
        %691 = vmatpush1.bf16.msra.mxu0 %v675
        %692 = vmatprep.subr.bf16.mxu0 0
        %693 = vmatpush1.bf16.msra.mxu0 %v674
        %694 = vmatprep.subr.bf16.mxu0 0
        %695 = vmatpush1.bf16.msra.mxu0 %v673
        %696 = vmatprep.subr.bf16.mxu0 0
        %697 = vmatpush1.bf16.msra.mxu0 %v672
        %698 = vmatprep.subr.bf16.mxu0 0
        %699 = vmatpush1.bf16.msra.mxu0 %v671
        %700 = vmatprep.subr.bf16.mxu0 0
        %701 = vmatpush1.bf16.msra.mxu0 %v670
        %702 = vmatprep.subr.bf16.mxu0 0
        %703 = vmatpush2.bf16.msra.mxu0 0
        %704 = vmatprep.subr.bf16.mxu0 0
        %705 = vmatpush2.bf16.msra.mxu0 0
        %706 = vmatprep.subr.bf16.mxu0 0
        %707 = vmatpush2.bf16.msra.mxu0 0
        %708 = vmatprep.subr.bf16.mxu0 0
        %709 = vmatpush2.bf16.msra.mxu0 0
        %710 = vmatprep.subr.bf16.mxu0 0
        %711 = vmatpush2.bf16.msra.mxu0 0
        %712 = vmatprep.subr.bf16.mxu0 0
        %713 = vmatpush2.bf16.msra.mxu0 0
        %714 = vmatprep.subr.bf16.mxu0 0
        %715 = vmatpush2.bf16.msra.mxu0 0
        %716 = vmatprep.subr.bf16.mxu0 0
        %717 = vmatpush2.bf16.msra.mxu0 0
        %718 = vmatprep.mubr.bf16.mxu0 0
        %719 = vmatmul.mubr.bf16.gmra.mxu0 %v607
        %v720 = vpop.f32.mrf.mxu0
        %v721 = vadd.f32 %v636, %v720
        %v722 = vpop.f32.mrf.mxu0
        %v723 = vpop.f32.mrf.mxu0
        %v724 = vadd.f32 %v636, %v723
        %v725 = vpop.f32.mrf.mxu0
        %726 = vmatprep.mubr.bf16.mxu0 0
        %727 = vmatmul.mubr.bf16.gmra.mxu0 %v608
        %v728 = vpop.f32.mrf.mxu0
        %v729 = vadd.f32 %v636, %v728
        %v730 = vpop.f32.mrf.mxu0
        %v731 = vpop.f32.mrf.mxu0
        %v732 = vadd.f32 %v636, %v731
        %v733 = vpop.f32.mrf.mxu0
        %734 = vmatprep.mubr.bf16.mxu0 0
        %735 = vmatmul.mubr.bf16.gmra.mxu0 %v609
        %v736 = vpop.f32.mrf.mxu0
        %v737 = vadd.f32 %v636, %v736
        %v738 = vpop.f32.mrf.mxu0
        %v739 = vpop.f32.mrf.mxu0
        %v740 = vadd.f32 %v636, %v739
        %v741 = vpop.f32.mrf.mxu0
        %742 = vmatprep.mubr.bf16.mxu0 0
        %743 = vmatmul.mubr.bf16.gmra.mxu0 %v610
        %v744 = vpop.f32.mrf.mxu0
        %v745 = vadd.f32 %v636, %v744
        %v746 = vpop.f32.mrf.mxu0
        %v747 = vpop.f32.mrf.mxu0
        %v748 = vadd.f32 %v636, %v747
        %v749 = vpop.f32.mrf.mxu0
        %750 = vmatprep.mubr.bf16.mxu0 0
        %751 = vmatmul.mubr.bf16.gmra.mxu0 %v611
        %v752 = vpop.f32.mrf.mxu0
        %v753 = vadd.f32 %v636, %v752
        %v754 = vpop.f32.mrf.mxu0
        %v755 = vpop.f32.mrf.mxu0
        %v756 = vadd.f32 %v636, %v755
        %v757 = vpop.f32.mrf.mxu0
        %758 = vmatprep.mubr.bf16.mxu0 0
        %759 = vmatmul.mubr.bf16.gmra.mxu0 %v612
        %v760 = vpop.f32.mrf.mxu0
        %v761 = vadd.f32 %v636, %v760
        %v762 = vpop.f32.mrf.mxu0
        %v763 = vpop.f32.mrf.mxu0
        %v764 = vadd.f32 %v636, %v763
        %v765 = vpop.f32.mrf.mxu0
        %766 = vmatprep.mubr.bf16.mxu0 0
        %767 = vmatmul.mubr.bf16.gmra.mxu0 %v613
        %v768 = vpop.f32.mrf.mxu0
        %v769 = vadd.f32 %v636, %v768
        %v770 = vpop.f32.mrf.mxu0
        %v771 = vpop.f32.mrf.mxu0
        %v772 = vadd.f32 %v636, %v771
        %v773 = vpop.f32.mrf.mxu0
        %774 = vmatprep.mubr.bf16.mxu0 0
        %775 = vmatmul.mubr.bf16.gmra.mxu0 %v614
        %v776 = vpop.f32.mrf.mxu0
        %v777 = vadd.f32 %v636, %v776
        %v778 = vpop.f32.mrf.mxu0
        %v779 = vpop.f32.mrf.mxu0
        %v780 = vadd.f32 %v636, %v779
        %v781 = vpop.f32.mrf.mxu0
        %782 = vdwg.mxu0
        %v783 = vadd.f32 %v721, %v591
        %v784 = vadd.f32 %v724, %v592
        %v785 = vadd.f32 %v729, %v593
        %v786 = vadd.f32 %v732, %v594
        %v787 = vadd.f32 %v737, %v595
        %v788 = vadd.f32 %v740, %v596
        %v789 = vadd.f32 %v745, %v597
        %v790 = vadd.f32 %v748, %v598
        %v791 = vadd.f32 %v753, %v599
        %v792 = vadd.f32 %v756, %v600
        %v793 = vadd.f32 %v761, %v601
        %v794 = vadd.f32 %v764, %v602
        %v795 = vadd.f32 %v769, %v603
        %v796 = vadd.f32 %v772, %v604
        %v797 = vadd.f32 %v777, %v605
        %v798 = vadd.f32 %v780, %v606
        %v799 = vmul.f32 %v783, 0.5
        %v800 = vmul.f32 %v784, 0.5
        %v801 = vmul.f32 %v785, 0.5
        %v802 = vmul.f32 %v786, 0.5
        %v803 = vmul.f32 %v787, 0.5
        %v804 = vmul.f32 %v788, 0.5
        %v805 = vmul.f32 %v789, 0.5
        %v806 = vmul.f32 %v790, 0.5
        %v807 = vmul.f32 %v791, 0.5
        %v808 = vmul.f32 %v792, 0.5
        %v809 = vmul.f32 %v793, 0.5
        %v810 = vmul.f32 %v794, 0.5
        %v811 = vmul.f32 %v795, 0.5
        %v812 = vmul.f32 %v796, 0.5
        %v813 = vmul.f32 %v797, 0.5
        %v814 = vmul.f32 %v798, 0.5
        %v815 = vmul.f32 %v783, 0.70710677
        %v816 = vmul.f32 %v784, 0.70710677
        %v817 = vmul.f32 %v785, 0.70710677
        %v818 = vmul.f32 %v786, 0.70710677
        %v819 = vmul.f32 %v787, 0.70710677
        %v820 = vmul.f32 %v788, 0.70710677
        %v821 = vmul.f32 %v789, 0.70710677
        %v822 = vmul.f32 %v790, 0.70710677
        %v823 = vmul.f32 %v791, 0.70710677
        %v824 = vmul.f32 %v792, 0.70710677
        %v825 = vmul.f32 %v793, 0.70710677
        %v826 = vmul.f32 %v794, 0.70710677
        %v827 = vmul.f32 %v795, 0.70710677
        %v828 = vmul.f32 %v796, 0.70710677
        %v829 = vmul.f32 %v797, 0.70710677
        %v830 = vmul.f32 %v798, 0.70710677
        %v831 = vand.u32 2147483647, %v815
        %v832 = vand.u32 2147483647, %v816
        %v833 = vand.u32 2147483647, %v817
        %v834 = vand.u32 2147483647, %v818
        %v835 = vand.u32 2147483647, %v819
        %v836 = vand.u32 2147483647, %v820
        %v837 = vand.u32 2147483647, %v821
        %v838 = vand.u32 2147483647, %v822
        %v839 = vand.u32 2147483647, %v823
        %v840 = vand.u32 2147483647, %v824
        %v841 = vand.u32 2147483647, %v825
        %v842 = vand.u32 2147483647, %v826
        %v843 = vand.u32 2147483647, %v827
        %v844 = vand.u32 2147483647, %v828
        %v845 = vand.u32 2147483647, %v829
        %v846 = vand.u32 2147483647, %v830
        %v847 = vmul.f32 %v831, 0.3275911
        %v848 = vmul.f32 %v832, 0.3275911
        %v849 = vmul.f32 %v833, 0.3275911
        %v850 = vmul.f32 %v834, 0.3275911
        %v851 = vmul.f32 %v835, 0.3275911
        %v852 = vmul.f32 %v836, 0.3275911
        %v853 = vmul.f32 %v837, 0.3275911
        %v854 = vmul.f32 %v838, 0.3275911
        %v855 = vmul.f32 %v839, 0.3275911
        %v856 = vmul.f32 %v840, 0.3275911
        %v857 = vmul.f32 %v841, 0.3275911
        %v858 = vmul.f32 %v842, 0.3275911
        %v859 = vmul.f32 %v843, 0.3275911
        %v860 = vmul.f32 %v844, 0.3275911
        %v861 = vmul.f32 %v845, 0.3275911
        %v862 = vmul.f32 %v846, 0.3275911
        %v863 = vadd.f32 %v847, 1.0
        %v864 = vadd.f32 %v848, 1.0
        %v865 = vadd.f32 %v849, 1.0
        %v866 = vadd.f32 %v850, 1.0
        %v867 = vadd.f32 %v851, 1.0
        %v868 = vadd.f32 %v852, 1.0
        %v869 = vadd.f32 %v853, 1.0
        %v870 = vadd.f32 %v854, 1.0
        %v871 = vadd.f32 %v855, 1.0
        %v872 = vadd.f32 %v856, 1.0
        %v873 = vadd.f32 %v857, 1.0
        %v874 = vadd.f32 %v858, 1.0
        %v875 = vadd.f32 %v859, 1.0
        %v876 = vadd.f32 %v860, 1.0
        %v877 = vadd.f32 %v861, 1.0
        %v878 = vadd.f32 %v862, 1.0
        %v879 = vrcp.pop %v863
        %v880 = vmul.f32 1.0, %v879
        %v881 = vrcp.pop %v864
        %v882 = vmul.f32 1.0, %v881
        %v883 = vrcp.pop %v865
        %v884 = vmul.f32 1.0, %v883
        %v885 = vrcp.pop %v866
        %v886 = vmul.f32 1.0, %v885
        %v887 = vrcp.pop %v867
        %v888 = vmul.f32 1.0, %v887
        %v889 = vrcp.pop %v868
        %v890 = vmul.f32 1.0, %v889
        %v891 = vrcp.pop %v869
        %v892 = vmul.f32 1.0, %v891
        %v893 = vrcp.pop %v870
        %v894 = vmul.f32 1.0, %v893
        %v895 = vrcp.pop %v871
        %v896 = vmul.f32 1.0, %v895
        %v897 = vrcp.pop %v872
        %v898 = vmul.f32 1.0, %v897
        %v899 = vrcp.pop %v873
        %v900 = vmul.f32 1.0, %v899
        %v901 = vrcp.pop %v874
        %v902 = vmul.f32 1.0, %v901
        %v903 = vrcp.pop %v875
        %v904 = vmul.f32 1.0, %v903
        %v905 = vrcp.pop %v876
        %v906 = vmul.f32 1.0, %v905
        %v907 = vrcp.pop %v877
        %v908 = vmul.f32 1.0, %v907
        %v909 = vrcp.pop %v878
        %v910 = vmul.f32 1.0, %v909
        %v911 = vmul.f32 %v880, 1.0614054
        %v912 = vmul.f32 %v882, 1.0614054
        %v913 = vmul.f32 %v884, 1.0614054
        %v914 = vmul.f32 %v886, 1.0614054
        %v915 = vmul.f32 %v888, 1.0614054
        %v916 = vmul.f32 %v890, 1.0614054
        %v917 = vmul.f32 %v892, 1.0614054
        %v918 = vmul.f32 %v894, 1.0614054
        %v919 = vmul.f32 %v896, 1.0614054
        %v920 = vmul.f32 %v898, 1.0614054
        %v921 = vmul.f32 %v900, 1.0614054
        %v922 = vmul.f32 %v902, 1.0614054
        %v923 = vmul.f32 %v904, 1.0614054
        %v924 = vmul.f32 %v906, 1.0614054
        %v925 = vmul.f32 %v908, 1.0614054
        %v926 = vmul.f32 %v910, 1.0614054
        %v927 = vadd.f32 %v911, -1.4531521
        %v928 = vadd.f32 %v912, -1.4531521
        %v929 = vadd.f32 %v913, -1.4531521
        %v930 = vadd.f32 %v914, -1.4531521
        %v931 = vadd.f32 %v915, -1.4531521
        %v932 = vadd.f32 %v916, -1.4531521
        %v933 = vadd.f32 %v917, -1.4531521
        %v934 = vadd.f32 %v918, -1.4531521
        %v935 = vadd.f32 %v919, -1.4531521
        %v936 = vadd.f32 %v920, -1.4531521
        %v937 = vadd.f32 %v921, -1.4531521
        %v938 = vadd.f32 %v922, -1.4531521
        %v939 = vadd.f32 %v923, -1.4531521
        %v940 = vadd.f32 %v924, -1.4531521
        %v941 = vadd.f32 %v925, -1.4531521
        %v942 = vadd.f32 %v926, -1.4531521
        %v943 = vmul.f32 %v927, %v880
        %v944 = vmul.f32 %v928, %v882
        %v945 = vmul.f32 %v929, %v884
        %v946 = vmul.f32 %v930, %v886
        %v947 = vmul.f32 %v931, %v888
        %v948 = vmul.f32 %v932, %v890
        %v949 = vmul.f32 %v933, %v892
        %v950 = vmul.f32 %v934, %v894
        %v951 = vmul.f32 %v935, %v896
        %v952 = vmul.f32 %v936, %v898
        %v953 = vmul.f32 %v937, %v900
        %v954 = vmul.f32 %v938, %v902
        %v955 = vmul.f32 %v939, %v904
        %v956 = vmul.f32 %v940, %v906
        %v957 = vmul.f32 %v941, %v908
        %v958 = vmul.f32 %v942, %v910
        %v959 = vadd.f32 %v943, 1.4214138
        %v960 = vadd.f32 %v944, 1.4214138
        %v961 = vadd.f32 %v945, 1.4214138
        %v962 = vadd.f32 %v946, 1.4214138
        %v963 = vadd.f32 %v947, 1.4214138
        %v964 = vadd.f32 %v948, 1.4214138
        %v965 = vadd.f32 %v949, 1.4214138
        %v966 = vadd.f32 %v950, 1.4214138
        %v967 = vadd.f32 %v951, 1.4214138
        %v968 = vadd.f32 %v952, 1.4214138
        %v969 = vadd.f32 %v953, 1.4214138
        %v970 = vadd.f32 %v954, 1.4214138
        %v971 = vadd.f32 %v955, 1.4214138
        %v972 = vadd.f32 %v956, 1.4214138
        %v973 = vadd.f32 %v957, 1.4214138
        %v974 = vadd.f32 %v958, 1.4214138
        %v975 = vmul.f32 %v959, %v880
        %v976 = vmul.f32 %v960, %v882
        %v977 = vmul.f32 %v961, %v884
        %v978 = vmul.f32 %v962, %v886
        %v979 = vmul.f32 %v963, %v888
        %v980 = vmul.f32 %v964, %v890
        %v981 = vmul.f32 %v965, %v892
        %v982 = vmul.f32 %v966, %v894
        %v983 = vmul.f32 %v967, %v896
        %v984 = vmul.f32 %v968, %v898
        %v985 = vmul.f32 %v969, %v900
        %v986 = vmul.f32 %v970, %v902
        %v987 = vmul.f32 %v971, %v904
        %v988 = vmul.f32 %v972, %v906
        %v989 = vmul.f32 %v973, %v908
        %v990 = vmul.f32 %v974, %v910
        %v991 = vadd.f32 %v975, -0.28449672
        %v992 = vadd.f32 %v976, -0.28449672
        %v993 = vadd.f32 %v977, -0.28449672
        %v994 = vadd.f32 %v978, -0.28449672
        %v995 = vadd.f32 %v979, -0.28449672
        %v996 = vadd.f32 %v980, -0.28449672
        %v997 = vadd.f32 %v981, -0.28449672
        %v998 = vadd.f32 %v982, -0.28449672
        %v999 = vadd.f32 %v983, -0.28449672
        %v1000 = vadd.f32 %v984, -0.28449672
        %v1001 = vadd.f32 %v985, -0.28449672
        %v1002 = vadd.f32 %v986, -0.28449672
        %v1003 = vadd.f32 %v987, -0.28449672
        %v1004 = vadd.f32 %v988, -0.28449672
        %v1005 = vadd.f32 %v989, -0.28449672
        %v1006 = vadd.f32 %v990, -0.28449672
        %v1007 = vmul.f32 %v991, %v880
        %v1008 = vmul.f32 %v992, %v882
        %v1009 = vmul.f32 %v993, %v884
        %v1010 = vmul.f32 %v994, %v886
        %v1011 = vmul.f32 %v995, %v888
        %v1012 = vmul.f32 %v996, %v890
        %v1013 = vmul.f32 %v997, %v892
        %v1014 = vmul.f32 %v998, %v894
        %v1015 = vmul.f32 %v999, %v896
        %v1016 = vmul.f32 %v1000, %v898
        %v1017 = vmul.f32 %v1001, %v900
        %v1018 = vmul.f32 %v1002, %v902
        %v1019 = vmul.f32 %v1003, %v904
        %v1020 = vmul.f32 %v1004, %v906
        %v1021 = vmul.f32 %v1005, %v908
        %v1022 = vmul.f32 %v1006, %v910
        %v1023 = vadd.f32 %v1007, 0.2548296
        %v1024 = vadd.f32 %v1008, 0.2548296
        %v1025 = vadd.f32 %v1009, 0.2548296
        %v1026 = vadd.f32 %v1010, 0.2548296
        %v1027 = vadd.f32 %v1011, 0.2548296
        %v1028 = vadd.f32 %v1012, 0.2548296
        %v1029 = vadd.f32 %v1013, 0.2548296
        %v1030 = vadd.f32 %v1014, 0.2548296
        %v1031 = vadd.f32 %v1015, 0.2548296
        %v1032 = vadd.f32 %v1016, 0.2548296
        %v1033 = vadd.f32 %v1017, 0.2548296
        %v1034 = vadd.f32 %v1018, 0.2548296
        %v1035 = vadd.f32 %v1019, 0.2548296
        %v1036 = vadd.f32 %v1020, 0.2548296
        %v1037 = vadd.f32 %v1021, 0.2548296
        %v1038 = vadd.f32 %v1022, 0.2548296
        %v1039 = vmul.f32 %v1023, %v880
        %v1040 = vmul.f32 %v1024, %v882
        %v1041 = vmul.f32 %v1025, %v884
        %v1042 = vmul.f32 %v1026, %v886
        %v1043 = vmul.f32 %v1027, %v888
        %v1044 = vmul.f32 %v1028, %v890
        %v1045 = vmul.f32 %v1029, %v892
        %v1046 = vmul.f32 %v1030, %v894
        %v1047 = vmul.f32 %v1031, %v896
        %v1048 = vmul.f32 %v1032, %v898
        %v1049 = vmul.f32 %v1033, %v900
        %v1050 = vmul.f32 %v1034, %v902
        %v1051 = vmul.f32 %v1035, %v904
        %v1052 = vmul.f32 %v1036, %v906
        %v1053 = vmul.f32 %v1037, %v908
        %v1054 = vmul.f32 %v1038, %v910
        %v1055 = vsub.f32 0.0, %v831
        %v1056 = vsub.f32 0.0, %v832
        %v1057 = vsub.f32 0.0, %v833
        %v1058 = vsub.f32 0.0, %v834
        %v1059 = vsub.f32 0.0, %v835
        %v1060 = vsub.f32 0.0, %v836
        %v1061 = vsub.f32 0.0, %v837
        %v1062 = vsub.f32 0.0, %v838
        %v1063 = vsub.f32 0.0, %v839
        %v1064 = vsub.f32 0.0, %v840
        %v1065 = vsub.f32 0.0, %v841
        %v1066 = vsub.f32 0.0, %v842
        %v1067 = vsub.f32 0.0, %v843
        %v1068 = vsub.f32 0.0, %v844
        %v1069 = vsub.f32 0.0, %v845
        %v1070 = vsub.f32 0.0, %v846
        %v1071 = vmul.f32 %v1055, %v831
        %v1072 = vmul.f32 %v1056, %v832
        %v1073 = vmul.f32 %v1057, %v833
        %v1074 = vmul.f32 %v1058, %v834
        %v1075 = vmul.f32 %v1059, %v835
        %v1076 = vmul.f32 %v1060, %v836
        %v1077 = vmul.f32 %v1061, %v837
        %v1078 = vmul.f32 %v1062, %v838
        %v1079 = vmul.f32 %v1063, %v839
        %v1080 = vmul.f32 %v1064, %v840
        %v1081 = vmul.f32 %v1065, %v841
        %v1082 = vmul.f32 %v1066, %v842
        %v1083 = vmul.f32 %v1067, %v843
        %v1084 = vmul.f32 %v1068, %v844
        %v1085 = vmul.f32 %v1069, %v845
        %v1086 = vmul.f32 %v1070, %v846
        %v1087 = vmul.f32 %v1071, 1.442695
        %v1088 = vpow.pop %v1087
        %v1089 = vmul.f32 %v1072, 1.442695
        %v1090 = vpow.pop %v1089
        %v1091 = vmul.f32 %v1073, 1.442695
        %v1092 = vpow.pop %v1091
        %v1093 = vmul.f32 %v1074, 1.442695
        %v1094 = vpow.pop %v1093
        %v1095 = vmul.f32 %v1075, 1.442695
        %v1096 = vpow.pop %v1095
        %v1097 = vmul.f32 %v1076, 1.442695
        %v1098 = vpow.pop %v1097
        %v1099 = vmul.f32 %v1077, 1.442695
        %v1100 = vpow.pop %v1099
        %v1101 = vmul.f32 %v1078, 1.442695
        %v1102 = vpow.pop %v1101
        %v1103 = vmul.f32 %v1079, 1.442695
        %v1104 = vpow.pop %v1103
        %v1105 = vmul.f32 %v1080, 1.442695
        %v1106 = vpow.pop %v1105
        %v1107 = vmul.f32 %v1081, 1.442695
        %v1108 = vpow.pop %v1107
        %v1109 = vmul.f32 %v1082, 1.442695
        %v1110 = vpow.pop %v1109
        %v1111 = vmul.f32 %v1083, 1.442695
        %v1112 = vpow.pop %v1111
        %v1113 = vmul.f32 %v1084, 1.442695
        %v1114 = vpow.pop %v1113
        %v1115 = vmul.f32 %v1085, 1.442695
        %v1116 = vpow.pop %v1115
        %v1117 = vmul.f32 %v1086, 1.442695
        %v1118 = vpow.pop %v1117
        %v1119 = vmul.f32 %v1039, %v1088
        %v1120 = vmul.f32 %v1040, %v1090
        %v1121 = vmul.f32 %v1041, %v1092
        %v1122 = vmul.f32 %v1042, %v1094
        %v1123 = vmul.f32 %v1043, %v1096
        %v1124 = vmul.f32 %v1044, %v1098
        %v1125 = vmul.f32 %v1045, %v1100
        %v1126 = vmul.f32 %v1046, %v1102
        %v1127 = vmul.f32 %v1047, %v1104
        %v1128 = vmul.f32 %v1048, %v1106
        %v1129 = vmul.f32 %v1049, %v1108
        %v1130 = vmul.f32 %v1050, %v1110
        %v1131 = vmul.f32 %v1051, %v1112
        %v1132 = vmul.f32 %v1052, %v1114
        %v1133 = vmul.f32 %v1053, %v1116
        %v1134 = vmul.f32 %v1054, %v1118
        %v1135 = vsub.f32 1.0, %v1119
        %v1136 = vsub.f32 1.0, %v1120
        %v1137 = vsub.f32 1.0, %v1121
        %v1138 = vsub.f32 1.0, %v1122
        %v1139 = vsub.f32 1.0, %v1123
        %v1140 = vsub.f32 1.0, %v1124
        %v1141 = vsub.f32 1.0, %v1125
        %v1142 = vsub.f32 1.0, %v1126
        %v1143 = vsub.f32 1.0, %v1127
        %v1144 = vsub.f32 1.0, %v1128
        %v1145 = vsub.f32 1.0, %v1129
        %v1146 = vsub.f32 1.0, %v1130
        %v1147 = vsub.f32 1.0, %v1131
        %v1148 = vsub.f32 1.0, %v1132
        %v1149 = vsub.f32 1.0, %v1133
        %v1150 = vsub.f32 1.0, %v1134
        %vm1151 = vcmp.lt.f32.partialorder %v815, 0.0
        %vm1152 = vcmp.lt.f32.partialorder %v816, 0.0
        %vm1153 = vcmp.lt.f32.partialorder %v817, 0.0
        %vm1154 = vcmp.lt.f32.partialorder %v818, 0.0
        %vm1155 = vcmp.lt.f32.partialorder %v819, 0.0
        %vm1156 = vcmp.lt.f32.partialorder %v820, 0.0
        %vm1157 = vcmp.lt.f32.partialorder %v821, 0.0
        %vm1158 = vcmp.lt.f32.partialorder %v822, 0.0
        %vm1159 = vcmp.lt.f32.partialorder %v823, 0.0
        %vm1160 = vcmp.lt.f32.partialorder %v824, 0.0
        %vm1161 = vcmp.lt.f32.partialorder %v825, 0.0
        %vm1162 = vcmp.lt.f32.partialorder %v826, 0.0
        %vm1163 = vcmp.lt.f32.partialorder %v827, 0.0
        %vm1164 = vcmp.lt.f32.partialorder %v828, 0.0
        %vm1165 = vcmp.lt.f32.partialorder %v829, 0.0
        %vm1166 = vcmp.lt.f32.partialorder %v830, 0.0
        %v1167 = vsub.f32 0.0, %v1135
        %v1168 = vsub.f32 0.0, %v1136
        %v1169 = vsub.f32 0.0, %v1137
        %v1170 = vsub.f32 0.0, %v1138
        %v1171 = vsub.f32 0.0, %v1139
        %v1172 = vsub.f32 0.0, %v1140
        %v1173 = vsub.f32 0.0, %v1141
        %v1174 = vsub.f32 0.0, %v1142
        %v1175 = vsub.f32 0.0, %v1143
        %v1176 = vsub.f32 0.0, %v1144
        %v1177 = vsub.f32 0.0, %v1145
        %v1178 = vsub.f32 0.0, %v1146
        %v1179 = vsub.f32 0.0, %v1147
        %v1180 = vsub.f32 0.0, %v1148
        %v1181 = vsub.f32 0.0, %v1149
        %v1182 = vsub.f32 0.0, %v1150
        %v1183 = vsel %vm1151, %v1167, %v1135
        %v1184 = vsel %vm1152, %v1168, %v1136
        %v1185 = vsel %vm1153, %v1169, %v1137
        %v1186 = vsel %vm1154, %v1170, %v1138
        %v1187 = vsel %vm1155, %v1171, %v1139
        %v1188 = vsel %vm1156, %v1172, %v1140
        %v1189 = vsel %vm1157, %v1173, %v1141
        %v1190 = vsel %vm1158, %v1174, %v1142
        %v1191 = vsel %vm1159, %v1175, %v1143
        %v1192 = vsel %vm1160, %v1176, %v1144
        %v1193 = vsel %vm1161, %v1177, %v1145
        %v1194 = vsel %vm1162, %v1178, %v1146
        %v1195 = vsel %vm1163, %v1179, %v1147
        %v1196 = vsel %vm1164, %v1180, %v1148
        %v1197 = vsel %vm1165, %v1181, %v1149
        %v1198 = vsel %vm1166, %v1182, %v1150
        %v1199 = vadd.f32 %v1183, 1.0
        %v1200 = vadd.f32 %v1184, 1.0
        %v1201 = vadd.f32 %v1185, 1.0
        %v1202 = vadd.f32 %v1186, 1.0
        %v1203 = vadd.f32 %v1187, 1.0
        %v1204 = vadd.f32 %v1188, 1.0
        %v1205 = vadd.f32 %v1189, 1.0
        %v1206 = vadd.f32 %v1190, 1.0
        %v1207 = vadd.f32 %v1191, 1.0
        %v1208 = vadd.f32 %v1192, 1.0
        %v1209 = vadd.f32 %v1193, 1.0
        %v1210 = vadd.f32 %v1194, 1.0
        %v1211 = vadd.f32 %v1195, 1.0
        %v1212 = vadd.f32 %v1196, 1.0
        %v1213 = vadd.f32 %v1197, 1.0
        %v1214 = vadd.f32 %v1198, 1.0
        %v1215 = vmul.f32 %v799, %v1199
        %v1216 = vmul.f32 %v800, %v1200
        %v1217 = vmul.f32 %v801, %v1201
        %v1218 = vmul.f32 %v802, %v1202
        %v1219 = vmul.f32 %v803, %v1203
        %v1220 = vmul.f32 %v804, %v1204
        %v1221 = vmul.f32 %v805, %v1205
        %v1222 = vmul.f32 %v806, %v1206
        %v1223 = vmul.f32 %v807, %v1207
        %v1224 = vmul.f32 %v808, %v1208
        %v1225 = vmul.f32 %v809, %v1209
        %v1226 = vmul.f32 %v810, %v1210
        %v1227 = vmul.f32 %v811, %v1211
        %v1228 = vmul.f32 %v812, %v1212
        %v1229 = vmul.f32 %v813, %v1213
        %v1230 = vmul.f32 %v814, %v1214
        %v1231 = vld [vmem:[%s469] sm:$0xff]
        %v1232 = vld [vmem:[%s469 + $0x8] sm:$0xff]
        %v1233 = vld [vmem:[%s469 + $0x10] sm:$0xff]
        %v1234 = vld [vmem:[%s469 + $0x18] sm:$0xff]
        %v1235 = vld [vmem:[%s469 + $0x20] sm:$0xff]
        %v1236 = vld [vmem:[%s469 + $0x28] sm:$0xff]
        %v1237 = vld [vmem:[%s469 + $0x30] sm:$0xff]
        %v1238 = vld [vmem:[%s469 + $0x38] sm:$0xff]
        %v1239 = vld [vmem:[%s469 + $0x40] sm:$0xff]
        %v1240 = vld [vmem:[%s469 + $0x48] sm:$0xff]
        %v1241 = vld [vmem:[%s469 + $0x50] sm:$0xff]
        %v1242 = vld [vmem:[%s469 + $0x58] sm:$0xff]
        %v1243 = vld [vmem:[%s469 + $0x60] sm:$0xff]
        %v1244 = vld [vmem:[%s469 + $0x68] sm:$0xff]
        %v1245 = vld [vmem:[%s469 + $0x70] sm:$0xff]
        %v1246 = vld [vmem:[%s469 + $0x78] sm:$0xff]
        %v1247 = vld [vmem:[%s402] sm:$0xff]
        %v1248 = vld [vmem:[%s402 + $0x8] sm:$0xff]
        %v1249 = vld [vmem:[%s402 + $0x10] sm:$0xff]
        %v1250 = vld [vmem:[%s402 + $0x18] sm:$0xff]
        %v1251 = vld [vmem:[%s402 + $0x20] sm:$0xff]
        %v1252 = vld [vmem:[%s402 + $0x28] sm:$0xff]
        %v1253 = vld [vmem:[%s402 + $0x30] sm:$0xff]
        %v1254 = vld [vmem:[%s402 + $0x38] sm:$0xff]
        %v1255 = vld [vmem:[%s402 + $0x40] sm:$0xff]
        %v1256 = vld [vmem:[%s402 + $0x48] sm:$0xff]
        %v1257 = vld [vmem:[%s402 + $0x50] sm:$0xff]
        %v1258 = vld [vmem:[%s402 + $0x58] sm:$0xff]
        %v1259 = vld [vmem:[%s402 + $0x60] sm:$0xff]
        %v1260 = vld [vmem:[%s402 + $0x68] sm:$0xff]
        %v1261 = vld [vmem:[%s402 + $0x70] sm:$0xff]
        %v1262 = vld [vmem:[%s402 + $0x78] sm:$0xff]
        %v1263 = vmul.f32 %v1247, %v1215
        %v1264 = vmul.f32 %v1248, %v1216
        %v1265 = vmul.f32 %v1249, %v1217
        %v1266 = vmul.f32 %v1250, %v1218
        %v1267 = vmul.f32 %v1251, %v1219
        %v1268 = vmul.f32 %v1252, %v1220
        %v1269 = vmul.f32 %v1253, %v1221
        %v1270 = vmul.f32 %v1254, %v1222
        %v1271 = vmul.f32 %v1255, %v1223
        %v1272 = vmul.f32 %v1256, %v1224
        %v1273 = vmul.f32 %v1257, %v1225
        %v1274 = vmul.f32 %v1258, %v1226
        %v1275 = vmul.f32 %v1259, %v1227
        %v1276 = vmul.f32 %v1260, %v1228
        %v1277 = vmul.f32 %v1261, %v1229
        %v1278 = vmul.f32 %v1262, %v1230
        %1279 = vadd.xlane.f32.xlu0 %v1263
        %v1280 = vpop.xlane.xlu0 %1279
        %1281 = vadd.xlane.f32.xlu0 %v1264
        %v1282 = vpop.xlane.xlu0 %1281
        %1283 = vadd.xlane.f32.xlu0 %v1265
        %v1284 = vpop.xlane.xlu0 %1283
        %1285 = vadd.xlane.f32.xlu0 %v1266
        %v1286 = vpop.xlane.xlu0 %1285
        %1287 = vadd.xlane.f32.xlu0 %v1267
        %v1288 = vpop.xlane.xlu0 %1287
        %1289 = vadd.xlane.f32.xlu0 %v1268
        %v1290 = vpop.xlane.xlu0 %1289
        %1291 = vadd.xlane.f32.xlu0 %v1269
        %v1292 = vpop.xlane.xlu0 %1291
        %1293 = vadd.xlane.f32.xlu0 %v1270
        %v1294 = vpop.xlane.xlu0 %1293
        %1295 = vadd.xlane.f32.xlu0 %v1271
        %v1296 = vpop.xlane.xlu0 %1295
        %1297 = vadd.xlane.f32.xlu0 %v1272
        %v1298 = vpop.xlane.xlu0 %1297
        %1299 = vadd.xlane.f32.xlu0 %v1273
        %v1300 = vpop.xlane.xlu0 %1299
        %1301 = vadd.xlane.f32.xlu0 %v1274
        %v1302 = vpop.xlane.xlu0 %1301
        %1303 = vadd.xlane.f32.xlu0 %v1275
        %v1304 = vpop.xlane.xlu0 %1303
        %1305 = vadd.xlane.f32.xlu0 %v1276
        %v1306 = vpop.xlane.xlu0 %1305
        %1307 = vadd.xlane.f32.xlu0 %v1277
        %v1308 = vpop.xlane.xlu0 %1307
        %1309 = vadd.xlane.f32.xlu0 %v1278
        %v1310 = vpop.xlane.xlu0 %1309
        %v1311 = vmul.f32 %v1280, 0.0078125
        %v1312 = vmul.f32 %v1282, 0.0078125
        %v1313 = vmul.f32 %v1284, 0.0078125
        %v1314 = vmul.f32 %v1286, 0.0078125
        %v1315 = vmul.f32 %v1288, 0.0078125
        %v1316 = vmul.f32 %v1290, 0.0078125
        %v1317 = vmul.f32 %v1292, 0.0078125
        %v1318 = vmul.f32 %v1294, 0.0078125
        %v1319 = vmul.f32 %v1296, 0.0078125
        %v1320 = vmul.f32 %v1298, 0.0078125
        %v1321 = vmul.f32 %v1300, 0.0078125
        %v1322 = vmul.f32 %v1302, 0.0078125
        %v1323 = vmul.f32 %v1304, 0.0078125
        %v1324 = vmul.f32 %v1306, 0.0078125
        %v1325 = vmul.f32 %v1308, 0.0078125
        %v1326 = vmul.f32 %v1310, 0.0078125
        %v1327 = vmul.f32 %v1231, %v1311
        %v1328 = vmul.f32 %v1232, %v1312
        %v1329 = vmul.f32 %v1233, %v1313
        %v1330 = vmul.f32 %v1234, %v1314
        %v1331 = vmul.f32 %v1235, %v1315
        %v1332 = vmul.f32 %v1236, %v1316
        %v1333 = vmul.f32 %v1237, %v1317
        %v1334 = vmul.f32 %v1238, %v1318
        %v1335 = vmul.f32 %v1239, %v1319
        %v1336 = vmul.f32 %v1240, %v1320
        %v1337 = vmul.f32 %v1241, %v1321
        %v1338 = vmul.f32 %v1242, %v1322
        %v1339 = vmul.f32 %v1243, %v1323
        %v1340 = vmul.f32 %v1244, %v1324
        %v1341 = vmul.f32 %v1245, %v1325
        %v1342 = vmul.f32 %v1246, %v1326
        %v1343 = vpack.c.bf16 %v1216, %v1215
        %v1344 = vpack.c.bf16 %v1218, %v1217
        %v1345 = vpack.c.bf16 %v1220, %v1219
        %v1346 = vpack.c.bf16 %v1222, %v1221
        %v1347 = vpack.c.bf16 %v1224, %v1223
        %v1348 = vpack.c.bf16 %v1226, %v1225
        %v1349 = vpack.c.bf16 %v1228, %v1227
        %v1350 = vpack.c.bf16 %v1230, %v1229
        %v1351 = vld [vmem:[%s5] sm:$0xf]
        %v1352 = vld [vmem:[%s5 + $0x4] sm:$0xf]
        %v1353 = vld [vmem:[%s5 + $0x8] sm:$0xf]
        %v1354 = vld [vmem:[%s5 + $0xc] sm:$0xf]
        %v1355 = vld [vmem:[%s5 + $0x10] sm:$0xf]
        %v1356 = vld [vmem:[%s5 + $0x14] sm:$0xf]
        %v1357 = vld [vmem:[%s5 + $0x18] sm:$0xf]
        %v1358 = vld [vmem:[%s5 + $0x1c] sm:$0xf]
        %v1359 = vld [vmem:[%s5 + $0x20] sm:$0xf]
        %v1360 = vld [vmem:[%s5 + $0x24] sm:$0xf]
        %v1361 = vld [vmem:[%s5 + $0x28] sm:$0xf]
        %v1362 = vld [vmem:[%s5 + $0x2c] sm:$0xf]
        %v1363 = vld [vmem:[%s5 + $0x30] sm:$0xf]
        %v1364 = vld [vmem:[%s5 + $0x34] sm:$0xf]
        %v1365 = vld [vmem:[%s5 + $0x38] sm:$0xf]
        %v1366 = vld [vmem:[%s5 + $0x3c] sm:$0xf]
        %v1367 = vld [vmem:[%s6] sm:$0x1]
        %v1369 = vlaneseq
        %v1370 = vshrl.u32 %v1369, 7
        %v1371 = vsub.s32 0, %v1370
        %v1372 = vrot.slane %v1367, %v1371
        %v1390 = vunpack.c.l.b16 %v1351
        %v1391 = vunpack.c.l.b16 %v1352
        %v1392 = vunpack.c.l.b16 %v1353
        %v1393 = vunpack.c.l.b16 %v1354
        %v1394 = vunpack.c.l.b16 %v1355
        %v1395 = vunpack.c.l.b16 %v1356
        %v1396 = vunpack.c.l.b16 %v1357
        %v1397 = vunpack.c.l.b16 %v1358
        %v1398 = vunpack.c.l.b16 %v1359
        %v1399 = vunpack.c.l.b16 %v1360
        %v1400 = vunpack.c.l.b16 %v1361
        %v1401 = vunpack.c.l.b16 %v1362
        %v1402 = vunpack.c.l.b16 %v1363
        %v1403 = vunpack.c.l.b16 %v1364
        %v1404 = vunpack.c.l.b16 %v1365
        %v1405 = vunpack.c.l.b16 %v1366
        %v1406 = vpack.c.b16 %v1391, %v1390
        %v1407 = vpack.c.b16 %v1393, %v1392
        %v1408 = vpack.c.b16 %v1395, %v1394
        %v1409 = vpack.c.b16 %v1397, %v1396
        %v1410 = vpack.c.b16 %v1399, %v1398
        %v1411 = vpack.c.b16 %v1401, %v1400
        %v1412 = vpack.c.b16 %v1403, %v1402
        %v1413 = vpack.c.b16 %v1405, %v1404
        %1422 = vmatprep.subr.bf16.mxu0 0
        %1423 = vmatpush1.bf16.msra.mxu0 %v1413
        %1424 = vmatprep.subr.bf16.mxu0 0
        %1425 = vmatpush1.bf16.msra.mxu0 %v1412
        %1426 = vmatprep.subr.bf16.mxu0 0
        %1427 = vmatpush1.bf16.msra.mxu0 %v1411
        %1428 = vmatprep.subr.bf16.mxu0 0
        %1429 = vmatpush1.bf16.msra.mxu0 %v1410
        %1430 = vmatprep.subr.bf16.mxu0 0
        %1431 = vmatpush1.bf16.msra.mxu0 %v1409
        %1432 = vmatprep.subr.bf16.mxu0 0
        %1433 = vmatpush1.bf16.msra.mxu0 %v1408
        %1434 = vmatprep.subr.bf16.mxu0 0
        %1435 = vmatpush1.bf16.msra.mxu0 %v1407
        %1436 = vmatprep.subr.bf16.mxu0 0
        %1437 = vmatpush1.bf16.msra.mxu0 %v1406
        %1438 = vmatprep.subr.bf16.mxu0 0
        %1439 = vmatpush2.bf16.msra.mxu0 0
        %1440 = vmatprep.subr.bf16.mxu0 0
        %1441 = vmatpush2.bf16.msra.mxu0 0
        %1442 = vmatprep.subr.bf16.mxu0 0
        %1443 = vmatpush2.bf16.msra.mxu0 0
        %1444 = vmatprep.subr.bf16.mxu0 0
        %1445 = vmatpush2.bf16.msra.mxu0 0
        %1446 = vmatprep.subr.bf16.mxu0 0
        %1447 = vmatpush2.bf16.msra.mxu0 0
        %1448 = vmatprep.subr.bf16.mxu0 0
        %1449 = vmatpush2.bf16.msra.mxu0 0
        %1450 = vmatprep.subr.bf16.mxu0 0
        %1451 = vmatpush2.bf16.msra.mxu0 0
        %1452 = vmatprep.subr.bf16.mxu0 0
        %1453 = vmatpush2.bf16.msra.mxu0 0
        %1454 = vmatprep.mubr.bf16.mxu0 0
        %1455 = vmatmul.mubr.bf16.gmra.mxu0 %v1343
        %v1456 = vpop.f32.mrf.mxu0
        %v1457 = vadd.f32 %v1372, %v1456
        %v1458 = vpop.f32.mrf.mxu0
        %v1459 = vpop.f32.mrf.mxu0
        %v1460 = vadd.f32 %v1372, %v1459
        %v1461 = vpop.f32.mrf.mxu0
        %1462 = vmatprep.mubr.bf16.mxu0 0
        %1463 = vmatmul.mubr.bf16.gmra.mxu0 %v1344
        %v1464 = vpop.f32.mrf.mxu0
        %v1465 = vadd.f32 %v1372, %v1464
        %v1466 = vpop.f32.mrf.mxu0
        %v1467 = vpop.f32.mrf.mxu0
        %v1468 = vadd.f32 %v1372, %v1467
        %v1469 = vpop.f32.mrf.mxu0
        %1470 = vmatprep.mubr.bf16.mxu0 0
        %1471 = vmatmul.mubr.bf16.gmra.mxu0 %v1345
        %v1472 = vpop.f32.mrf.mxu0
        %v1473 = vadd.f32 %v1372, %v1472
        %v1474 = vpop.f32.mrf.mxu0
        %v1475 = vpop.f32.mrf.mxu0
        %v1476 = vadd.f32 %v1372, %v1475
        %v1477 = vpop.f32.mrf.mxu0
        %1478 = vmatprep.mubr.bf16.mxu0 0
        %1479 = vmatmul.mubr.bf16.gmra.mxu0 %v1346
        %v1480 = vpop.f32.mrf.mxu0
        %v1481 = vadd.f32 %v1372, %v1480
        %v1482 = vpop.f32.mrf.mxu0
        %v1483 = vpop.f32.mrf.mxu0
        %v1484 = vadd.f32 %v1372, %v1483
        %v1485 = vpop.f32.mrf.mxu0
        %1486 = vmatprep.mubr.bf16.mxu0 0
        %1487 = vmatmul.mubr.bf16.gmra.mxu0 %v1347
        %v1488 = vpop.f32.mrf.mxu0
        %v1489 = vadd.f32 %v1372, %v1488
        %v1490 = vpop.f32.mrf.mxu0
        %v1491 = vpop.f32.mrf.mxu0
        %v1492 = vadd.f32 %v1372, %v1491
        %v1493 = vpop.f32.mrf.mxu0
        %1494 = vmatprep.mubr.bf16.mxu0 0
        %1495 = vmatmul.mubr.bf16.gmra.mxu0 %v1348
        %v1496 = vpop.f32.mrf.mxu0
        %v1497 = vadd.f32 %v1372, %v1496
        %v1498 = vpop.f32.mrf.mxu0
        %v1499 = vpop.f32.mrf.mxu0
        %v1500 = vadd.f32 %v1372, %v1499
        %v1501 = vpop.f32.mrf.mxu0
        %1502 = vmatprep.mubr.bf16.mxu0 0
        %1503 = vmatmul.mubr.bf16.gmra.mxu0 %v1349
        %v1504 = vpop.f32.mrf.mxu0
        %v1505 = vadd.f32 %v1372, %v1504
        %v1506 = vpop.f32.mrf.mxu0
        %v1507 = vpop.f32.mrf.mxu0
        %v1508 = vadd.f32 %v1372, %v1507
        %v1509 = vpop.f32.mrf.mxu0
        %1510 = vmatprep.mubr.bf16.mxu0 0
        %1511 = vmatmul.mubr.bf16.gmra.mxu0 %v1350
        %v1512 = vpop.f32.mrf.mxu0
        %v1513 = vadd.f32 %v1372, %v1512
        %v1514 = vpop.f32.mrf.mxu0
        %v1515 = vpop.f32.mrf.mxu0
        %v1516 = vadd.f32 %v1372, %v1515
        %v1517 = vpop.f32.mrf.mxu0
        %1518 = vdwg.mxu0
        %v1519 = vadd.f32 %v1457, %v1327
        %v1520 = vadd.f32 %v1460, %v1328
        %v1521 = vadd.f32 %v1465, %v1329
        %v1522 = vadd.f32 %v1468, %v1330
        %v1523 = vadd.f32 %v1473, %v1331
        %v1524 = vadd.f32 %v1476, %v1332
        %v1525 = vadd.f32 %v1481, %v1333
        %v1526 = vadd.f32 %v1484, %v1334
        %v1527 = vadd.f32 %v1489, %v1335
        %v1528 = vadd.f32 %v1492, %v1336
        %v1529 = vadd.f32 %v1497, %v1337
        %v1530 = vadd.f32 %v1500, %v1338
        %v1531 = vadd.f32 %v1505, %v1339
        %v1532 = vadd.f32 %v1508, %v1340
        %v1533 = vadd.f32 %v1513, %v1341
        %v1534 = vadd.f32 %v1516, %v1342
        %vm1535 = vcmask 162816
        %1536 = vst.msk [vmem:[%s476] sm:$0xff] %vm1535, %v1519
        %1537 = vst.msk [vmem:[%s476 + $0x8] sm:$0xff] %vm1535, %v1520
        %1538 = vst.msk [vmem:[%s476 + $0x10] sm:$0xff] %vm1535, %v1521
        %1539 = vst.msk [vmem:[%s476 + $0x18] sm:$0xff] %vm1535, %v1522
        %1540 = vst.msk [vmem:[%s476 + $0x20] sm:$0xff] %vm1535, %v1523
        %1541 = vst.msk [vmem:[%s476 + $0x28] sm:$0xff] %vm1535, %v1524
        %1542 = vst.msk [vmem:[%s476 + $0x30] sm:$0xff] %vm1535, %v1525
        %1543 = vst.msk [vmem:[%s476 + $0x38] sm:$0xff] %vm1535, %v1526
        %1544 = vst.msk [vmem:[%s476 + $0x40] sm:$0xff] %vm1535, %v1527
        %1545 = vst.msk [vmem:[%s476 + $0x48] sm:$0xff] %vm1535, %v1528
        %1546 = vst.msk [vmem:[%s476 + $0x50] sm:$0xff] %vm1535, %v1529
        %1547 = vst.msk [vmem:[%s476 + $0x58] sm:$0xff] %vm1535, %v1530
        %1548 = vst.msk [vmem:[%s476 + $0x60] sm:$0xff] %vm1535, %v1531
        %1549 = vst.msk [vmem:[%s476 + $0x68] sm:$0xff] %vm1535, %v1532
        %1550 = vst.msk [vmem:[%s476 + $0x70] sm:$0xff] %vm1535, %v1533
        %1551 = vst.msk [vmem:[%s476 + $0x78] sm:$0xff] %vm1535, %v1534
        %s1552 = smul.u32 16, %s26
        %p1553 = scmp.lt.s32.totalorder %s1552, 31
        %s1554 = scalar_select %p1553, %s1552, 31
        %s1555 = smul.addr %s1554, 8
        %s1556 = scalar_lea.vmem %s9, %s1555
        // Predicated region
        $region69: #{tpu_custom_call.1} parent=55 // pred_check
          %p1557 = pneg %p258
        $region70: #{tpu_custom_call.1} parent=55 // pred_check_branch
          %1559 = sbr.rel (%p1557) target = $region72
        $region71: #{tpu_custom_call.1} parent=55 // pred_region
          %s1560 = smul.u32 16, %s26
        $region72: #{tpu_custom_call.1} parent=55 // pred_fallthru
          _
      $region56: #{tpu_custom_call.1} parent=5 // pred_fallthru
        _
      %p1561 = scmp.le.s32.totalorder 2, %s21
      // Predicated region
      $region73: #{tpu_custom_call.1} parent=5 // pred_check
        %p1562 = pneg %p1561
      $region74: #{tpu_custom_call.1} parent=5 // pred_check_branch
        %1564 = sbr.rel (%p1562) target = $region76
      $region75: #{tpu_custom_call.1} parent=5 // pred_region
        %s1565 = ssub.s32 %s21, 2
        // Predicated region
        $region77: #{tpu_custom_call.1} parent=75 // pred_check
          %p1566 = pneg %p264
        $region78: #{tpu_custom_call.1} parent=75 // pred_check_branch
          %1568 = sbr.rel (%p1566) target = $region80
        $region79: #{tpu_custom_call.1} parent=75 // pred_region
          %s1569 = smul.u32 16, %s27
          %p1570 = scmp.lt.s32.totalorder %s1569, 31
          %s1571 = scalar_select %p1570, %s1569, 31
          %s1572 = smul.addr %s1571, 8
          %s1573 = scalar_lea.vmem %s9, %s1572
        $region80: #{tpu_custom_call.1} parent=75 // pred_fallthru
          _
      $region76: #{tpu_custom_call.1} parent=5 // pred_fallthru
        _
    $region6: #{tpu_custom_call.1} parent=1 // loop_footer
      %s25 = sadd.s32 1, %s21
    $region7: #{tpu_custom_call.1} parent=1 // loop_footer_branch
      %20 = sbr.rel target = $region3
    $region8: #{tpu_custom_call.1} parent=1 // loop_exit
      _
    %1574 = vsyncpa [#allocation3], 1
    %s1575 = scalar_lea.sflag [#allocation3], 1
    %1576 = vsyncpa %s1575, 1
    %1577 = vsyncpa [#allocation5], 1
    %s1578 = scalar_lea.sflag [#allocation5], 1
    %1579 = vsyncpa %s1578, 1

</llo_original>
